<compile_context>
chip_gen: v5e
topology: v5e:2x2
jax: 0.10.0
libtpu: 0.0.40
codegen_flags: <defaults>
</compile_context>

<pallas_src>
import functools
import math

import jax
import jax.numpy as jnp
from jax import lax
from jax.experimental import pallas as pl
from jax.experimental.pallas import tpu as pltpu

LN_EPS = 1e-12                 # pytorchic-bert LayerNorm variance epsilon
MXU_DTYPE = jnp.bfloat16       # MXU operand dtype (accumulation stays f32)


# ----------------------------- in-kernel helpers -----------------------------

def _layernorm(x, gamma, beta):
    # biased variance over last dim, matching pytorchic-bert LayerNorm (f32 stats)
    u = jnp.mean(x, axis=-1, keepdims=True)
    s = jnp.mean((x - u) ** 2, axis=-1, keepdims=True)
    return gamma * ((x - u) * lax.rsqrt(s + LN_EPS)) + beta


def _gelu(x):
    # exact (erf-based) gelu used by the reference implementation
    return x * 0.5 * (1.0 + lax.erf(x * (1.0 / math.sqrt(2.0))))


def _mxu(a, b):
    # MXU matmul: bf16 operands, f32 accumulation
    return jnp.dot(a.astype(MXU_DTYPE), b.astype(MXU_DTYPE),
                   preferred_element_type=jnp.float32)


# --------------------------------- fused kernel --------------------------------

def fused_forward_kernel(n_heads, nb,
                         e_ref, bias_ref,
                         wqkv_ref, wo_ref, w1_ref, w2_ref, vec_ref, gvec_ref,
                         logits_ref,
                         h_scr, ctx_scr):
    l = pl.program_id(1)
    n_layers = pl.num_programs(1)
    T, D = h_scr.shape                 # T = nb * S (rows of this batch block)
    S = T // nb
    dh = D // n_heads
    Fdim = w1_ref.shape[-1]

    gvec = gvec_ref[...]                                   # (4, D) f32

    # ---- phase 0 of each batch block: embedding LayerNorm -> activation scratch --
    @pl.when(l == 0)
    def _():
        e = e_ref[...].reshape(T, D)
        h_scr[...] = _layernorm(e, gvec[0:1, :], gvec[1:2, :])

    x = h_scr[...]                                         # (T, D) f32
    vec = vec_ref[0]                                       # (10, VW) packed vectors

    # ---- fused QKV projection (1/sqrt(dh) folded into Q weight/bias on host) -----
    # q/k/v are only ever consumed by MXU matmuls -> keep them bf16.
    qkv = _mxu(x, wqkv_ref[0])                             # (T, 3D) f32
    q = (qkv[:, 0 * D:1 * D] + vec[0:1, :D]).reshape(nb, S, D).astype(MXU_DTYPE)
    k = (qkv[:, 1 * D:2 * D] + vec[1:2, :D]).reshape(nb, S, D).astype(MXU_DTYPE)
    v = (qkv[:, 2 * D:3 * D] + vec[2:3, :D]).reshape(nb, S, D).astype(MXU_DTYPE)

    neg_bias = bias_ref[...]                               # (nb, 1, S), precomputed

    # ---- attention: each head's context is stored into ctx_scr at its lane offset
    # so the output projection runs once as a full-width matmul (no per-head Wo
    # matmuls, no (S,D) f32 accumulator held live across heads).
    for h in range(n_heads):           # static loop; per-head live set bounded by
        sl = slice(h * dh, (h + 1) * dh)   # the ctx_scr store
        sc = jnp.einsum('bqd,bkd->bqk', q[:, :, sl], k[:, :, sl],
                        preferred_element_type=jnp.float32) + neg_bias
        sc = sc - jnp.max(sc, axis=-1, keepdims=True)
        p = jnp.exp(sc)
        p = p * pl.reciprocal(jnp.sum(p, axis=-1, keepdims=True), approx=True)
        ctx = jnp.einsum('bqk,bkd->bqd', p.astype(MXU_DTYPE), v[:, :, sl],
                         preferred_element_type=jnp.float32)       # (nb, S, dh)
        ctx_scr[:, sl] = ctx.reshape(T, dh).astype(MXU_DTYPE)

    proj = _mxu(ctx_scr[...], wo_ref[0]) + vec[3:4, :D]    # one (T,D)@(D,D) matmul
    h1 = _layernorm(x + proj, vec[4:5, :D], vec[5:6, :D])

    # ---- feed-forward (intermediate kept bf16 after the gelu) --------------------
    ff = _gelu(_mxu(h1, w1_ref[0]) + vec[6:7, :Fdim]).astype(MXU_DTYPE)   # (T, F)
    ff = _mxu(ff, w2_ref[0]) + vec[7:8, :D]                               # (T, D)
    h2 = _layernorm(h1 + ff, vec[8:9, :D], vec[9:10, :D])

    h_scr[...] = h2                                        # carry to next layer

    # ---- classifier head (last layer only) ---------------------------------------
    # NOTE: the reference's dense->activation->norm branch is dead code (its result
    # is discarded by the PyTorch forward), so it is intentionally not computed.
    @pl.when(l == n_layers - 1)
    def _():
        # logits = h2 @ wc + bc as a VPU multiply + lane reduce (no 1-wide MXU op);
        # emitted lane-dense as (nb, 1, S).
        h3 = h2.reshape(nb, S, D)
        lg = jnp.sum(h3 * gvec[2:3, :], axis=-1) + gvec[3:4, 0:1]   # (nb, S)
        logits_ref[...] = lg[:, None, :]


# ------------------------------ pallas wrapper ---------------------------------

def _pick_batch_block(batch, target=8):
    """Largest divisor of `batch` not exceeding `target` (weight-DMA amortization)."""
    nb = 1
    for cand in range(1, min(batch, target) + 1):
        if batch % cand == 0:
            nb = cand
    return nb


def _vmem_limit_bytes(cfg, nb, seq):
    """Scoped-VMEM budget from the actual working set (double-buffered weights +
    activations), clamped to a range that is safe on v5e/v6e/v7x."""
    D, F = cfg['dim'], cfg['dim_ff']
    VW = max(D, F)
    bf, f32 = 2, 4
    T = nb * seq
    wts = 2 * (D * 3 * D + D * D + D * F + F * D) * bf     # double-buffered layer weights
    vecs = 2 * 10 * VW * f32 + 4 * D * f32                 # packed bias rows + gvec
    act = T * D * (f32 + bf)                               # h_scr + ctx_scr
    act += T * 3 * D * (f32 + bf)                          # qkv f32 + q/k/v bf16
    act += T * F * (f32 + bf)                              # FFN intermediate
    act += 2 * nb * seq * seq * f32                        # per-head score tiles (slack)
    io = 2 * (T * D * f32 + 2 * nb * seq * f32)            # e / bias / logits blocks
    est = int(1.5 * (wts + vecs + act + io)) + (2 << 20)
    return max(32 << 20, min(est, 64 << 20))


def pack_params(params, cfg):
    """One-time packing (call at init, NOT per forward): stack per-layer weights on
    a leading layer axis, fold the 1/sqrt(dh) scale into Q, pack all tiny vectors,
    cast MXU weights to bf16, and carry the embedding tables along."""
    D, F, H = cfg['dim'], cfg['dim_ff'], cfg['n_heads']
    VW = max(D, F)
    scale = 1.0 / math.sqrt(D // H)

    def pad_row(v):
        v = v.reshape(-1)
        return jnp.pad(v, (0, VW - v.shape[0]))

    wqkv, wo, w1, w2, vecs = [], [], [], [], []
    for p in params['blocks']:
        wqkv.append(jnp.concatenate([p['wq'] * scale, p['wk'], p['wv']], axis=1))
        wo.append(p['wo'])
        w1.append(p['w1'])
        w2.append(p['w2'])
        rows = [p['bq'] * scale, p['bk'], p['bv'], p['bo'],
                p['g1'], p['be1'], p['bf1'], p['bf2'], p['g2'], p['be2']]
        vecs.append(jnp.stack([pad_row(r) for r in rows]))

    gvec = jnp.stack([params['embed_gamma'].reshape(-1),
                      params['embed_beta'].reshape(-1),
                      params['wc'].reshape(-1),
                      jnp.full((D,), params['bc'].reshape(-1)[0])])

    return dict(
        tok_embed=params['tok_embed'],
        pos_embed=params['pos_embed'],
        seg_embed=params['seg_embed'],
        wqkv=jnp.stack(wqkv).astype(MXU_DTYPE),
        wo=jnp.stack(wo).astype(MXU_DTYPE),
        w1=jnp.stack(w1).astype(MXU_DTYPE),
        w2=jnp.stack(w2).astype(MXU_DTYPE),
        vecs=jnp.stack(vecs).astype(jnp.float32),
        gvec=gvec.astype(jnp.float32))


def fused_forward(e, neg_bias, packed, cfg):
    B, S, D = e.shape
    L, F, H = cfg['n_layers'], cfg['dim_ff'], cfg['n_heads']
    VW = packed['vecs'].shape[-1]
    nb = _pick_batch_block(B, cfg.get('batch_block', 8))   # rows per grid step

    grid_spec = pltpu.PrefetchScalarGridSpec(
        num_scalar_prefetch=0,
        grid=(B // nb, L),
        in_specs=[
            pl.BlockSpec((nb, S, D), lambda b, l: (b, 0, 0)),       # embeddings
            pl.BlockSpec((nb, 1, S), lambda b, l: (b, 0, 0)),       # precomputed mask bias
            pl.BlockSpec((1, D, 3 * D), lambda b, l: (l, 0, 0)),    # packed Wqkv
            pl.BlockSpec((1, D, D), lambda b, l: (l, 0, 0)),        # Wo
            pl.BlockSpec((1, D, F), lambda b, l: (l, 0, 0)),        # W1 (FFN in)
            pl.BlockSpec((1, F, D), lambda b, l: (l, 0, 0)),        # W2 (FFN out)
            pl.BlockSpec((1, 10, VW), lambda b, l: (l, 0, 0)),      # packed biases/LN
            pl.BlockSpec((4, D), lambda b, l: (0, 0)),              # embed LN + classifier
        ],
        out_specs=pl.BlockSpec((nb, 1, S), lambda b, l: (b, 0, 0)),
        scratch_shapes=[pltpu.VMEM((nb * S, D), jnp.float32),       # resident activation
                        pltpu.VMEM((nb * S, D), MXU_DTYPE)],        # per-head ctx assembly
    )
    logits = pl.pallas_call(
        functools.partial(fused_forward_kernel, H, nb),
        grid_spec=grid_spec,
        out_shape=jax.ShapeDtypeStruct((B, 1, S), jnp.float32),
        compiler_params=pltpu.CompilerParams(
            dimension_semantics=("parallel", "arbitrary"),
            vmem_limit_bytes=_vmem_limit_bytes(cfg, nb, S)),
    )(e, neg_bias, packed['wqkv'], packed['wo'], packed['w1'], packed['w2'],
      packed['vecs'], packed['gvec'])
    return logits.reshape(B, S, 1)                                  # reference layout


# ------------------------------ model / params --------------------------------

CFG = dict(vocab_size=100, dim=32, dim_ff=64, n_layers=2, n_heads=4,
           max_len=16, n_segments=2, batch_block=8)


def init_params(key, cfg):
    keys = iter(jax.random.split(key, 128))

    def w(shape, scale=0.02):
        return scale * jax.random.normal(next(keys), shape, jnp.float32)

    D, F = cfg['dim'], cfg['dim_ff']
    params = dict(
        tok_embed=w((cfg['vocab_size'], D)),
        pos_embed=w((cfg['max_len'], D)),
        seg_embed=w((cfg['n_segments'], D)),
        embed_gamma=jnp.ones((1, D), jnp.float32),
        embed_beta=jnp.zeros((1, D), jnp.float32),
        blocks=[],
        # classifier head.  The reference also has `dense = Linear(D, D)` whose
        # output is discarded by forward(); that dead branch is not computed.
        wc=w((D, 1)), bc=jnp.zeros((1, 1), jnp.float32),
    )
    for _ in range(cfg['n_layers']):
        params['blocks'].append(dict(
            wq=w((D, D)), bq=jnp.zeros((1, D), jnp.float32),
            wk=w((D, D)), bk=jnp.zeros((1, D), jnp.float32),
            wv=w((D, D)), bv=jnp.zeros((1, D), jnp.float32),
            wo=w((D, D)), bo=jnp.zeros((1, D), jnp.float32),
            g1=jnp.ones((1, D), jnp.float32), be1=jnp.zeros((1, D), jnp.float32),
            w1=w((D, F)), bf1=jnp.zeros((1, F), jnp.float32),
            w2=w((F, D)), bf2=jnp.zeros((1, D), jnp.float32),
            g2=jnp.ones((1, D), jnp.float32), be2=jnp.zeros((1, D), jnp.float32),
        ))
    return params


def discriminator_forward(packed, x, seg, is_replaced_label=None,
                          input_mask=None, cfg=CFG):
    """Forward pass on pre-packed weights (pack_params is NOT called here)."""
    B, S = x.shape
    # --- embeddings (data-dependent gather = plain-JAX glue) ---
    e = (jnp.take(packed['tok_embed'], x, axis=0)
         + packed['pos_embed'][:S][None, :, :]
         + jnp.take(packed['seg_embed'], seg, axis=0))

    mask_f = (input_mask.astype(jnp.float32) if input_mask is not None
              else jnp.ones((B, S), jnp.float32))       # ones <=> no masking
    # additive mask bias computed once here, streamed into the kernel
    neg_bias = (-10000.0 * (1.0 - mask_f)).reshape(B, 1, S)

    logits = fused_forward(e, neg_bias, packed, cfg)     # (B, S, 1)
    outputs = (logits,)

    if is_replaced_label is not None:
        # plain-JAX glue: BCEWithLogitsLoss (mean) over active positions
        lg = logits.reshape(-1, S)
        lb = is_replaced_label.reshape(-1, S).astype(jnp.float32)
        bce = jnp.maximum(lg, 0.0) - lg * lb + jnp.log1p(jnp.exp(-jnp.abs(lg)))
        if input_mask is not None:
            m = (input_mask.reshape(-1, S) == 1).astype(jnp.float32)
            disc_loss = jnp.sum(bce * m) / jnp.maximum(jnp.sum(m), 1.0)
        else:
            disc_loss = jnp.mean(bce)
        outputs += (disc_loss,)
    return outputs


# ----------------------------------- main --------------------------------------

if __name__ == "__main__":
    key = jax.random.PRNGKey(0)
    k_par, k_x, k_seg, k_lbl = jax.random.split(key, 4)

    params = init_params(k_par, CFG)
    packed = pack_params(params, CFG)      # ONE-TIME repack, hoisted out of forward

    B, S = 2, 8
    x = jax.random.randint(k_x, (B, S), 0, CFG['vocab_size'], dtype=jnp.int32)
    seg = jax.random.randint(k_seg, (B, S), 0, CFG['n_segments'], dtype=jnp.int32)
    input_mask = jnp.ones((B, S), jnp.int32).at[:, -2:].set(0)   # last 2 tokens padded
    labels = jax.random.randint(k_lbl, (B, S), 0, 2, dtype=jnp.int32)

    fwd = jax.jit(functools.partial(discriminator_forward, cfg=CFG))

    # default forward: outputs = (logits,)
    (logits,) = fwd(packed, x, seg, None, input_mask)
    jax.block_until_ready(logits)
    assert logits.shape == (B, S, 1)

    # forward with replaced-token labels: outputs = (logits, disc_loss)
    logits2, loss = fwd(packed, x, seg, labels, input_mask)
    jax.block_until_ready((logits2, loss))
    assert logits2.shape == (B, S, 1) and loss.shape == ()

    print("KERNEL_OK")
</pallas_src>

<mosaic_0001>
module attributes {stable_mosaic.version = 11 : i64} {
  func.func @fused_forward_kernel(%arg0: i32, %arg1: i32, %arg2: memref<2x8x32xf32, #tpu.memory_space<vmem>>, %arg3: memref<2x1x8xf32, #tpu.memory_space<vmem>>, %arg4: memref<1x32x96xbf16, #tpu.memory_space<vmem>>, %arg5: memref<1x32x32xbf16, #tpu.memory_space<vmem>>, %arg6: memref<1x32x64xbf16, #tpu.memory_space<vmem>>, %arg7: memref<1x64x32xbf16, #tpu.memory_space<vmem>>, %arg8: memref<1x10x64xf32, #tpu.memory_space<vmem>>, %arg9: memref<4x32xf32, #tpu.memory_space<vmem>>, %arg10: memref<2x1x8xf32, #tpu.memory_space<vmem>>, %arg11: memref<16x32xf32, #tpu.memory_space<vmem>>, %arg12: memref<16x32xbf16, #tpu.memory_space<vmem>>) attributes {dimension_semantics = [#tpu.dimension_semantics<parallel>, #tpu.dimension_semantics<arbitrary>], iteration_bounds = array<i64: 1, 2>, scalar_prefetch = 0 : i64, scratch_operands = 2 : i64, tpu.core_type = #tpu.core_type<tc>, window_params = [{transform_indices = @transform_0, window_bounds = array<i64: 2, 8, 32>}, {transform_indices = @transform_1, window_bounds = array<i64: 2, 1, 8>}, {transform_indices = @transform_2, window_bounds = array<i64: 1, 32, 96>}, {transform_indices = @transform_3, window_bounds = array<i64: 1, 32, 32>}, {transform_indices = @transform_4, window_bounds = array<i64: 1, 32, 64>}, {transform_indices = @transform_5, window_bounds = array<i64: 1, 64, 32>}, {transform_indices = @transform_6, window_bounds = array<i64: 1, 10, 64>}, {pipeline_mode = #tpu.pipeline_mode<synchronous>, transform_indices = @transform_7, window_bounds = array<i64: 4, 32>}, {transform_indices = @transform_8, window_bounds = array<i64: 2, 1, 8>}]} {
    %c0 = arith.constant 0 : index
    %c0_0 = arith.constant 0 : index
    %0 = vector.load %arg9[%c0, %c0_0] : memref<4x32xf32, #tpu.memory_space<vmem>>, vector<4x32xf32>
    %c0_i32 = arith.constant 0 : i32
    %1 = arith.cmpi eq, %arg1, %c0_i32 : i32
    %2 = arith.extui %1 : i1 to i32
    %c0_i32_1 = arith.constant 0 : i32
    %3 = arith.cmpi ne, %2, %c0_i32_1 : i32
    scf.if %3 {
      %c0_64 = arith.constant 0 : index
      %c0_65 = arith.constant 0 : index
      %c0_66 = arith.constant 0 : index
      %197 = vector.load %arg2[%c0_64, %c0_65, %c0_66] : memref<2x8x32xf32, #tpu.memory_space<vmem>>, vector<2x8x32xf32>
      %198 = vector.shape_cast %197 : vector<2x8x32xf32> to vector<16x32xf32>
      %199 = vector.extract_strided_slice %0 {offsets = [0, 0], sizes = [1, 32], strides = [1, 1]} : vector<4x32xf32> to vector<1x32xf32>
      %200 = vector.extract_strided_slice %0 {offsets = [1, 0], sizes = [1, 32], strides = [1, 1]} : vector<4x32xf32> to vector<1x32xf32>
      %cst_67 = arith.constant dense<0.000000e+00> : vector<16xf32>
      %201 = vector.multi_reduction <add>, %198, %cst_67 [1] : vector<16x32xf32> to vector<16xf32>
      %202 = vector.shape_cast %201 : vector<16xf32> to vector<16x1xf32>
      %cst_68 = arith.constant 3.200000e+01 : f32
      %203 = vector.broadcast %cst_68 : f32 to vector<16x1xf32>
      %204 = arith.divf %202, %203 : vector<16x1xf32>
      %205 = vector.broadcast %204 : vector<16x1xf32> to vector<16x32xf32>
      %206 = arith.subf %198, %205 : vector<16x32xf32>
      %207 = arith.mulf %206, %206 : vector<16x32xf32>
      %cst_69 = arith.constant dense<0.000000e+00> : vector<16xf32>
      %208 = vector.multi_reduction <add>, %207, %cst_69 [1] : vector<16x32xf32> to vector<16xf32>
      %209 = vector.shape_cast %208 : vector<16xf32> to vector<16x1xf32>
      %cst_70 = arith.constant 3.200000e+01 : f32
      %210 = vector.broadcast %cst_70 : f32 to vector<16x1xf32>
      %211 = arith.divf %209, %210 : vector<16x1xf32>
      %212 = vector.broadcast %204 : vector<16x1xf32> to vector<16x32xf32>
      %213 = arith.subf %198, %212 : vector<16x32xf32>
      %cst_71 = arith.constant 9.99999996E-13 : f32
      %214 = vector.broadcast %cst_71 : f32 to vector<16x1xf32>
      %215 = arith.addf %211, %214 : vector<16x1xf32>
      %216 = math.rsqrt %215 : vector<16x1xf32>
      %217 = vector.broadcast %216 : vector<16x1xf32> to vector<16x32xf32>
      %218 = arith.mulf %213, %217 : vector<16x32xf32>
      %219 = vector.broadcast %199 : vector<1x32xf32> to vector<16x32xf32>
      %220 = arith.mulf %219, %218 : vector<16x32xf32>
      %221 = vector.broadcast %200 : vector<1x32xf32> to vector<16x32xf32>
      %222 = arith.addf %220, %221 : vector<16x32xf32>
      %c0_72 = arith.constant 0 : index
      %c0_73 = arith.constant 0 : index
      %223 = vector.load %arg11[%c0_72, %c0_73] : memref<16x32xf32, #tpu.memory_space<vmem>>, vector<16x32xf32>
      tpu.vector_store %arg11[%c0_72, %c0_73], %222 {strides = array<i32>} : memref<16x32xf32, #tpu.memory_space<vmem>>, vector<16x32xf32>,
    } else {
    }
    %c0_2 = arith.constant 0 : index
    %c0_3 = arith.constant 0 : index
    %4 = vector.load %arg11[%c0_2, %c0_3] : memref<16x32xf32, #tpu.memory_space<vmem>>, vector<16x32xf32>
    %c0_4 = arith.constant 0 : index
    %c0_5 = arith.constant 0 : index
    %c0_6 = arith.constant 0 : index
    %5 = vector.load %arg8[%c0_4, %c0_5, %c0_6] : memref<1x10x64xf32, #tpu.memory_space<vmem>>, vector<1x10x64xf32>
    %6 = vector.shape_cast %5 : vector<1x10x64xf32> to vector<10x64xf32>
    %c0_7 = arith.constant 0 : index
    %c0_8 = arith.constant 0 : index
    %c0_9 = arith.constant 0 : index
    %7 = vector.load %arg4[%c0_7, %c0_8, %c0_9] : memref<1x32x96xbf16, #tpu.memory_space<vmem>>, vector<1x32x96xbf16>
    %8 = vector.shape_cast %7 : vector<1x32x96xbf16> to vector<32x96xbf16>
    %9 = arith.truncf %4 : vector<16x32xf32> to vector<16x32xbf16>
    %cst = arith.constant dense<0.000000e+00> : vector<16x96xf32>
    %10 = tpu.matmul %9, %8, %cst {dimension_numbers = #tpu.dot_dimension_numbers<[1], [0], [0], [1], [0, 0, 1, 1], [], []>} : vector<16x32xbf16>, vector<32x96xbf16>, vector<16x96xf32> -> vector<16x96xf32>
    %11 = vector.extract_strided_slice %10 {offsets = [0, 0], sizes = [16, 32], strides = [1, 1]} : vector<16x96xf32> to vector<16x32xf32>
    %12 = vector.extract_strided_slice %6 {offsets = [0, 0], sizes = [1, 32], strides = [1, 1]} : vector<10x64xf32> to vector<1x32xf32>
    %13 = vector.broadcast %12 : vector<1x32xf32> to vector<16x32xf32>
    %14 = arith.addf %11, %13 : vector<16x32xf32>
    %15 = vector.shape_cast %14 : vector<16x32xf32> to vector<2x8x32xf32>
    %16 = arith.truncf %15 : vector<2x8x32xf32> to vector<2x8x32xbf16>
    %17 = vector.extract_strided_slice %10 {offsets = [0, 32], sizes = [16, 32], strides = [1, 1]} : vector<16x96xf32> to vector<16x32xf32>
    %18 = vector.extract_strided_slice %6 {offsets = [1, 0], sizes = [1, 32], strides = [1, 1]} : vector<10x64xf32> to vector<1x32xf32>
    %19 = vector.broadcast %18 : vector<1x32xf32> to vector<16x32xf32>
    %20 = arith.addf %17, %19 : vector<16x32xf32>
    %21 = vector.shape_cast %20 : vector<16x32xf32> to vector<2x8x32xf32>
    %22 = arith.truncf %21 : vector<2x8x32xf32> to vector<2x8x32xbf16>
    %23 = vector.extract_strided_slice %10 {offsets = [0, 64], sizes = [16, 32], strides = [1, 1]} : vector<16x96xf32> to vector<16x32xf32>
    %24 = vector.extract_strided_slice %6 {offsets = [2, 0], sizes = [1, 32], strides = [1, 1]} : vector<10x64xf32> to vector<1x32xf32>
    %25 = vector.broadcast %24 : vector<1x32xf32> to vector<16x32xf32>
    %26 = arith.addf %23, %25 : vector<16x32xf32>
    %27 = vector.shape_cast %26 : vector<16x32xf32> to vector<2x8x32xf32>
    %28 = arith.truncf %27 : vector<2x8x32xf32> to vector<2x8x32xbf16>
    %c0_10 = arith.constant 0 : index
    %c0_11 = arith.constant 0 : index
    %c0_12 = arith.constant 0 : index
    %29 = vector.load %arg3[%c0_10, %c0_11, %c0_12] : memref<2x1x8xf32, #tpu.memory_space<vmem>>, vector<2x1x8xf32>
    %30 = vector.extract_strided_slice %16 {offsets = [0, 0, 0], sizes = [2, 8, 8], strides = [1, 1, 1]} : vector<2x8x32xbf16> to vector<2x8x8xbf16>
    %31 = vector.extract_strided_slice %22 {offsets = [0, 0, 0], sizes = [2, 8, 8], strides = [1, 1, 1]} : vector<2x8x32xbf16> to vector<2x8x8xbf16>
    "tpu.trace_start"() <{level = 10 : i32, message = "bqd,bkd->bqk"}> : () -> ()
    %cst_13 = arith.constant dense<0.000000e+00> : vector<2x8x8xf32>
    %32 = tpu.matmul %30, %31, %cst_13 {dimension_numbers = #tpu.dot_dimension_numbers<[2], [2], [1], [1], [0, 0, 0, 1, 1, 1], [0], [0]>} : vector<2x8x8xbf16>, vector<2x8x8xbf16>, vector<2x8x8xf32> -> vector<2x8x8xf32>
    "tpu.trace_stop"() : () -> ()
    %33 = vector.broadcast %29 : vector<2x1x8xf32> to vector<2x8x8xf32>
    %34 = arith.addf %32, %33 : vector<2x8x8xf32>
    %cst_14 = arith.constant dense<0xFF800000> : vector<2x8xf32>
    %35 = vector.multi_reduction <maximumf>, %34, %cst_14 [2] : vector<2x8x8xf32> to vector<2x8xf32>
    %36 = vector.shape_cast %35 : vector<2x8xf32> to vector<2x8x1xf32>
    %37 = vector.broadcast %36 : vector<2x8x1xf32> to vector<2x8x8xf32>
    %38 = arith.subf %34, %37 : vector<2x8x8xf32>
    %39 = math.exp %38 : vector<2x8x8xf32>
    %cst_15 = arith.constant dense<0.000000e+00> : vector<2x8xf32>
    %40 = vector.multi_reduction <add>, %39, %cst_15 [2] : vector<2x8x8xf32> to vector<2x8xf32>
    %41 = vector.shape_cast %40 : vector<2x8xf32> to vector<2x8x1xf32>
    %42 = tpu.reciprocal %41 {approx = true} : vector<2x8x1xf32> -> vector<2x8x1xf32>
    %43 = vector.broadcast %42 : vector<2x8x1xf32> to vector<2x8x8xf32>
    %44 = arith.mulf %39, %43 : vector<2x8x8xf32>
    %45 = arith.truncf %44 : vector<2x8x8xf32> to vector<2x8x8xbf16>
    %46 = vector.extract_strided_slice %28 {offsets = [0, 0, 0], sizes = [2, 8, 8], strides = [1, 1, 1]} : vector<2x8x32xbf16> to vector<2x8x8xbf16>
    "tpu.trace_start"() <{level = 10 : i32, message = "bqk,bkd->bqd"}> : () -> ()
    %cst_16 = arith.constant dense<0.000000e+00> : vector<2x8x8xf32>
    %47 = tpu.matmul %45, %46, %cst_16 {dimension_numbers = #tpu.dot_dimension_numbers<[2], [1], [1], [2], [0, 0, 0, 1, 1, 2], [0], [0]>} : vector<2x8x8xbf16>, vector<2x8x8xbf16>, vector<2x8x8xf32> -> vector<2x8x8xf32>
    "tpu.trace_stop"() : () -> ()
    %48 = vector.shape_cast %47 : vector<2x8x8xf32> to vector<16x8xf32>
    %49 = arith.truncf %48 : vector<16x8xf32> to vector<16x8xbf16>
    %c0_17 = arith.constant 0 : index
    %c0_18 = arith.constant 0 : index
    %50 = vector.load %arg12[%c0_17, %c0_18] : memref<16x32xbf16, #tpu.memory_space<vmem>>, vector<16x8xbf16>
    tpu.vector_store %arg12[%c0_17, %c0_18], %49 {strides = array<i32>} : memref<16x32xbf16, #tpu.memory_space<vmem>>, vector<16x8xbf16>,
    %51 = vector.extract_strided_slice %16 {offsets = [0, 0, 8], sizes = [2, 8, 8], strides = [1, 1, 1]} : vector<2x8x32xbf16> to vector<2x8x8xbf16>
    %52 = vector.extract_strided_slice %22 {offsets = [0, 0, 8], sizes = [2, 8, 8], strides = [1, 1, 1]} : vector<2x8x32xbf16> to vector<2x8x8xbf16>
    "tpu.trace_start"() <{level = 10 : i32, message = "bqd,bkd->bqk"}> : () -> ()
    %cst_19 = arith.constant dense<0.000000e+00> : vector<2x8x8xf32>
    %53 = tpu.matmul %51, %52, %cst_19 {dimension_numbers = #tpu.dot_dimension_numbers<[2], [2], [1], [1], [0, 0, 0, 1, 1, 1], [0], [0]>} : vector<2x8x8xbf16>, vector<2x8x8xbf16>, vector<2x8x8xf32> -> vector<2x8x8xf32>
    "tpu.trace_stop"() : () -> ()
    %54 = vector.broadcast %29 : vector<2x1x8xf32> to vector<2x8x8xf32>
    %55 = arith.addf %53, %54 : vector<2x8x8xf32>
    %cst_20 = arith.constant dense<0xFF800000> : vector<2x8xf32>
    %56 = vector.multi_reduction <maximumf>, %55, %cst_20 [2] : vector<2x8x8xf32> to vector<2x8xf32>
    %57 = vector.shape_cast %56 : vector<2x8xf32> to vector<2x8x1xf32>
    %58 = vector.broadcast %57 : vector<2x8x1xf32> to vector<2x8x8xf32>
    %59 = arith.subf %55, %58 : vector<2x8x8xf32>
    %60 = math.exp %59 : vector<2x8x8xf32>
    %cst_21 = arith.constant dense<0.000000e+00> : vector<2x8xf32>
    %61 = vector.multi_reduction <add>, %60, %cst_21 [2] : vector<2x8x8xf32> to vector<2x8xf32>
    %62 = vector.shape_cast %61 : vector<2x8xf32> to vector<2x8x1xf32>
    %63 = tpu.reciprocal %62 {approx = true} : vector<2x8x1xf32> -> vector<2x8x1xf32>
    %64 = vector.broadcast %63 : vector<2x8x1xf32> to vector<2x8x8xf32>
    %65 = arith.mulf %60, %64 : vector<2x8x8xf32>
    %66 = arith.truncf %65 : vector<2x8x8xf32> to vector<2x8x8xbf16>
    %67 = vector.extract_strided_slice %28 {offsets = [0, 0, 8], sizes = [2, 8, 8], strides = [1, 1, 1]} : vector<2x8x32xbf16> to vector<2x8x8xbf16>
    "tpu.trace_start"() <{level = 10 : i32, message = "bqk,bkd->bqd"}> : () -> ()
    %cst_22 = arith.constant dense<0.000000e+00> : vector<2x8x8xf32>
    %68 = tpu.matmul %66, %67, %cst_22 {dimension_numbers = #tpu.dot_dimension_numbers<[2], [1], [1], [2], [0, 0, 0, 1, 1, 2], [0], [0]>} : vector<2x8x8xbf16>, vector<2x8x8xbf16>, vector<2x8x8xf32> -> vector<2x8x8xf32>
    "tpu.trace_stop"() : () -> ()
    %69 = vector.shape_cast %68 : vector<2x8x8xf32> to vector<16x8xf32>
    %70 = arith.truncf %69 : vector<16x8xf32> to vector<16x8xbf16>
    %c0_23 = arith.constant 0 : index
    %c8 = arith.constant 8 : index
    %71 = vector.load %arg12[%c0_23, %c8] : memref<16x32xbf16, #tpu.memory_space<vmem>>, vector<16x8xbf16>
    tpu.vector_store %arg12[%c0_23, %c8], %70 {strides = array<i32>} : memref<16x32xbf16, #tpu.memory_space<vmem>>, vector<16x8xbf16>,
    %72 = vector.extract_strided_slice %16 {offsets = [0, 0, 16], sizes = [2, 8, 8], strides = [1, 1, 1]} : vector<2x8x32xbf16> to vector<2x8x8xbf16>
    %73 = vector.extract_strided_slice %22 {offsets = [0, 0, 16], sizes = [2, 8, 8], strides = [1, 1, 1]} : vector<2x8x32xbf16> to vector<2x8x8xbf16>
    "tpu.trace_start"() <{level = 10 : i32, message = "bqd,bkd->bqk"}> : () -> ()
    %cst_24 = arith.constant dense<0.000000e+00> : vector<2x8x8xf32>
    %74 = tpu.matmul %72, %73, %cst_24 {dimension_numbers = #tpu.dot_dimension_numbers<[2], [2], [1], [1], [0, 0, 0, 1, 1, 1], [0], [0]>} : vector<2x8x8xbf16>, vector<2x8x8xbf16>, vector<2x8x8xf32> -> vector<2x8x8xf32>
    "tpu.trace_stop"() : () -> ()
    %75 = vector.broadcast %29 : vector<2x1x8xf32> to vector<2x8x8xf32>
    %76 = arith.addf %74, %75 : vector<2x8x8xf32>
    %cst_25 = arith.constant dense<0xFF800000> : vector<2x8xf32>
    %77 = vector.multi_reduction <maximumf>, %76, %cst_25 [2] : vector<2x8x8xf32> to vector<2x8xf32>
    %78 = vector.shape_cast %77 : vector<2x8xf32> to vector<2x8x1xf32>
    %79 = vector.broadcast %78 : vector<2x8x1xf32> to vector<2x8x8xf32>
    %80 = arith.subf %76, %79 : vector<2x8x8xf32>
    %81 = math.exp %80 : vector<2x8x8xf32>
    %cst_26 = arith.constant dense<0.000000e+00> : vector<2x8xf32>
    %82 = vector.multi_reduction <add>, %81, %cst_26 [2] : vector<2x8x8xf32> to vector<2x8xf32>
    %83 = vector.shape_cast %82 : vector<2x8xf32> to vector<2x8x1xf32>
    %84 = tpu.reciprocal %83 {approx = true} : vector<2x8x1xf32> -> vector<2x8x1xf32>
    %85 = vector.broadcast %84 : vector<2x8x1xf32> to vector<2x8x8xf32>
    %86 = arith.mulf %81, %85 : vector<2x8x8xf32>
    %87 = arith.truncf %86 : vector<2x8x8xf32> to vector<2x8x8xbf16>
    %88 = vector.extract_strided_slice %28 {offsets = [0, 0, 16], sizes = [2, 8, 8], strides = [1, 1, 1]} : vector<2x8x32xbf16> to vector<2x8x8xbf16>
    "tpu.trace_start"() <{level = 10 : i32, message = "bqk,bkd->bqd"}> : () -> ()
    %cst_27 = arith.constant dense<0.000000e+00> : vector<2x8x8xf32>
    %89 = tpu.matmul %87, %88, %cst_27 {dimension_numbers = #tpu.dot_dimension_numbers<[2], [1], [1], [2], [0, 0, 0, 1, 1, 2], [0], [0]>} : vector<2x8x8xbf16>, vector<2x8x8xbf16>, vector<2x8x8xf32> -> vector<2x8x8xf32>
    "tpu.trace_stop"() : () -> ()
    %90 = vector.shape_cast %89 : vector<2x8x8xf32> to vector<16x8xf32>
    %91 = arith.truncf %90 : vector<16x8xf32> to vector<16x8xbf16>
    %c0_28 = arith.constant 0 : index
    %c16 = arith.constant 16 : index
    %92 = vector.load %arg12[%c0_28, %c16] : memref<16x32xbf16, #tpu.memory_space<vmem>>, vector<16x8xbf16>
    tpu.vector_store %arg12[%c0_28, %c16], %91 {strides = array<i32>} : memref<16x32xbf16, #tpu.memory_space<vmem>>, vector<16x8xbf16>,
    %93 = vector.extract_strided_slice %16 {offsets = [0, 0, 24], sizes = [2, 8, 8], strides = [1, 1, 1]} : vector<2x8x32xbf16> to vector<2x8x8xbf16>
    %94 = vector.extract_strided_slice %22 {offsets = [0, 0, 24], sizes = [2, 8, 8], strides = [1, 1, 1]} : vector<2x8x32xbf16> to vector<2x8x8xbf16>
    "tpu.trace_start"() <{level = 10 : i32, message = "bqd,bkd->bqk"}> : () -> ()
    %cst_29 = arith.constant dense<0.000000e+00> : vector<2x8x8xf32>
    %95 = tpu.matmul %93, %94, %cst_29 {dimension_numbers = #tpu.dot_dimension_numbers<[2], [2], [1], [1], [0, 0, 0, 1, 1, 1], [0], [0]>} : vector<2x8x8xbf16>, vector<2x8x8xbf16>, vector<2x8x8xf32> -> vector<2x8x8xf32>
    "tpu.trace_stop"() : () -> ()
    %96 = vector.broadcast %29 : vector<2x1x8xf32> to vector<2x8x8xf32>
    %97 = arith.addf %95, %96 : vector<2x8x8xf32>
    %cst_30 = arith.constant dense<0xFF800000> : vector<2x8xf32>
    %98 = vector.multi_reduction <maximumf>, %97, %cst_30 [2] : vector<2x8x8xf32> to vector<2x8xf32>
    %99 = vector.shape_cast %98 : vector<2x8xf32> to vector<2x8x1xf32>
    %100 = vector.broadcast %99 : vector<2x8x1xf32> to vector<2x8x8xf32>
    %101 = arith.subf %97, %100 : vector<2x8x8xf32>
    %102 = math.exp %101 : vector<2x8x8xf32>
    %cst_31 = arith.constant dense<0.000000e+00> : vector<2x8xf32>
    %103 = vector.multi_reduction <add>, %102, %cst_31 [2] : vector<2x8x8xf32> to vector<2x8xf32>
    %104 = vector.shape_cast %103 : vector<2x8xf32> to vector<2x8x1xf32>
    %105 = tpu.reciprocal %104 {approx = true} : vector<2x8x1xf32> -> vector<2x8x1xf32>
    %106 = vector.broadcast %105 : vector<2x8x1xf32> to vector<2x8x8xf32>
    %107 = arith.mulf %102, %106 : vector<2x8x8xf32>
    %108 = arith.truncf %107 : vector<2x8x8xf32> to vector<2x8x8xbf16>
    %109 = vector.extract_strided_slice %28 {offsets = [0, 0, 24], sizes = [2, 8, 8], strides = [1, 1, 1]} : vector<2x8x32xbf16> to vector<2x8x8xbf16>
    "tpu.trace_start"() <{level = 10 : i32, message = "bqk,bkd->bqd"}> : () -> ()
    %cst_32 = arith.constant dense<0.000000e+00> : vector<2x8x8xf32>
    %110 = tpu.matmul %108, %109, %cst_32 {dimension_numbers = #tpu.dot_dimension_numbers<[2], [1], [1], [2], [0, 0, 0, 1, 1, 2], [0], [0]>} : vector<2x8x8xbf16>, vector<2x8x8xbf16>, vector<2x8x8xf32> -> vector<2x8x8xf32>
    "tpu.trace_stop"() : () -> ()
    %111 = vector.shape_cast %110 : vector<2x8x8xf32> to vector<16x8xf32>
    %112 = arith.truncf %111 : vector<16x8xf32> to vector<16x8xbf16>
    %c0_33 = arith.constant 0 : index
    %c24 = arith.constant 24 : index
    %113 = vector.load %arg12[%c0_33, %c24] : memref<16x32xbf16, #tpu.memory_space<vmem>>, vector<16x8xbf16>
    tpu.vector_store %arg12[%c0_33, %c24], %112 {strides = array<i32>} : memref<16x32xbf16, #tpu.memory_space<vmem>>, vector<16x8xbf16>,
    %c0_34 = arith.constant 0 : index
    %c0_35 = arith.constant 0 : index
    %114 = vector.load %arg12[%c0_34, %c0_35] : memref<16x32xbf16, #tpu.memory_space<vmem>>, vector<16x32xbf16>
    %c0_36 = arith.constant 0 : index
    %c0_37 = arith.constant 0 : index
    %c0_38 = arith.constant 0 : index
    %115 = vector.load %arg5[%c0_36, %c0_37, %c0_38] : memref<1x32x32xbf16, #tpu.memory_space<vmem>>, vector<1x32x32xbf16>
    %116 = vector.shape_cast %115 : vector<1x32x32xbf16> to vector<32x32xbf16>
    %cst_39 = arith.constant dense<0.000000e+00> : vector<16x32xf32>
    %117 = tpu.matmul %114, %116, %cst_39 {dimension_numbers = #tpu.dot_dimension_numbers<[1], [0], [0], [1], [0, 0, 1, 1], [], []>} : vector<16x32xbf16>, vector<32x32xbf16>, vector<16x32xf32> -> vector<16x32xf32>
    %118 = vector.extract_strided_slice %6 {offsets = [3, 0], sizes = [1, 32], strides = [1, 1]} : vector<10x64xf32> to vector<1x32xf32>
    %119 = vector.broadcast %118 : vector<1x32xf32> to vector<16x32xf32>
    %120 = arith.addf %117, %119 : vector<16x32xf32>
    %121 = arith.addf %4, %120 : vector<16x32xf32>
    %122 = vector.extract_strided_slice %6 {offsets = [4, 0], sizes = [1, 32], strides = [1, 1]} : vector<10x64xf32> to vector<1x32xf32>
    %123 = vector.extract_strided_slice %6 {offsets = [5, 0], sizes = [1, 32], strides = [1, 1]} : vector<10x64xf32> to vector<1x32xf32>
    %cst_40 = arith.constant dense<0.000000e+00> : vector<16xf32>
    %124 = vector.multi_reduction <add>, %121, %cst_40 [1] : vector<16x32xf32> to vector<16xf32>
    %125 = vector.shape_cast %124 : vector<16xf32> to vector<16x1xf32>
    %cst_41 = arith.constant 3.200000e+01 : f32
    %126 = vector.broadcast %cst_41 : f32 to vector<16x1xf32>
    %127 = arith.divf %125, %126 : vector<16x1xf32>
    %128 = vector.broadcast %127 : vector<16x1xf32> to vector<16x32xf32>
    %129 = arith.subf %121, %128 : vector<16x32xf32>
    %130 = arith.mulf %129, %129 : vector<16x32xf32>
    %cst_42 = arith.constant dense<0.000000e+00> : vector<16xf32>
    %131 = vector.multi_reduction <add>, %130, %cst_42 [1] : vector<16x32xf32> to vector<16xf32>
    %132 = vector.shape_cast %131 : vector<16xf32> to vector<16x1xf32>
    %cst_43 = arith.constant 3.200000e+01 : f32
    %133 = vector.broadcast %cst_43 : f32 to vector<16x1xf32>
    %134 = arith.divf %132, %133 : vector<16x1xf32>
    %135 = vector.broadcast %127 : vector<16x1xf32> to vector<16x32xf32>
    %136 = arith.subf %121, %135 : vector<16x32xf32>
    %cst_44 = arith.constant 9.99999996E-13 : f32
    %137 = vector.broadcast %cst_44 : f32 to vector<16x1xf32>
    %138 = arith.addf %134, %137 : vector<16x1xf32>
    %139 = math.rsqrt %138 : vector<16x1xf32>
    %140 = vector.broadcast %139 : vector<16x1xf32> to vector<16x32xf32>
    %141 = arith.mulf %136, %140 : vector<16x32xf32>
    %142 = vector.broadcast %122 : vector<1x32xf32> to vector<16x32xf32>
    %143 = arith.mulf %142, %141 : vector<16x32xf32>
    %144 = vector.broadcast %123 : vector<1x32xf32> to vector<16x32xf32>
    %145 = arith.addf %143, %144 : vector<16x32xf32>
    %c0_45 = arith.constant 0 : index
    %c0_46 = arith.constant 0 : index
    %c0_47 = arith.constant 0 : index
    %146 = vector.load %arg6[%c0_45, %c0_46, %c0_47] : memref<1x32x64xbf16, #tpu.memory_space<vmem>>, vector<1x32x64xbf16>
    %147 = vector.shape_cast %146 : vector<1x32x64xbf16> to vector<32x64xbf16>
    %148 = arith.truncf %145 : vector<16x32xf32> to vector<16x32xbf16>
    %cst_48 = arith.constant dense<0.000000e+00> : vector<16x64xf32>
    %149 = tpu.matmul %148, %147, %cst_48 {dimension_numbers = #tpu.dot_dimension_numbers<[1], [0], [0], [1], [0, 0, 1, 1], [], []>} : vector<16x32xbf16>, vector<32x64xbf16>, vector<16x64xf32> -> vector<16x64xf32>
    %150 = vector.extract_strided_slice %6 {offsets = [6, 0], sizes = [1, 64], strides = [1, 1]} : vector<10x64xf32> to vector<1x64xf32>
    %151 = vector.broadcast %150 : vector<1x64xf32> to vector<16x64xf32>
    %152 = arith.addf %149, %151 : vector<16x64xf32>
    %cst_49 = arith.constant 5.000000e-01 : f32
    %153 = vector.broadcast %cst_49 : f32 to vector<16x64xf32>
    %154 = arith.mulf %152, %153 : vector<16x64xf32>
    %cst_50 = arith.constant 0.707106769 : f32
    %155 = vector.broadcast %cst_50 : f32 to vector<16x64xf32>
    %156 = arith.mulf %152, %155 : vector<16x64xf32>
    %157 = math.erf %156 : vector<16x64xf32>
    %cst_51 = arith.constant 1.000000e+00 : f32
    %158 = vector.broadcast %cst_51 : f32 to vector<16x64xf32>
    %159 = arith.addf %158, %157 : vector<16x64xf32>
    %160 = arith.mulf %154, %159 : vector<16x64xf32>
    %161 = arith.truncf %160 : vector<16x64xf32> to vector<16x64xbf16>
    %c0_52 = arith.constant 0 : index
    %c0_53 = arith.constant 0 : index
    %c0_54 = arith.constant 0 : index
    %162 = vector.load %arg7[%c0_52, %c0_53, %c0_54] : memref<1x64x32xbf16, #tpu.memory_space<vmem>>, vector<1x64x32xbf16>
    %163 = vector.shape_cast %162 : vector<1x64x32xbf16> to vector<64x32xbf16>
    %cst_55 = arith.constant dense<0.000000e+00> : vector<16x32xf32>
    %164 = tpu.matmul %161, %163, %cst_55 {dimension_numbers = #tpu.dot_dimension_numbers<[1], [0], [0], [1], [0, 0, 1, 1], [], []>} : vector<16x64xbf16>, vector<64x32xbf16>, vector<16x32xf32> -> vector<16x32xf32>
    %165 = vector.extract_strided_slice %6 {offsets = [7, 0], sizes = [1, 32], strides = [1, 1]} : vector<10x64xf32> to vector<1x32xf32>
    %166 = vector.broadcast %165 : vector<1x32xf32> to vector<16x32xf32>
    %167 = arith.addf %164, %166 : vector<16x32xf32>
    %168 = arith.addf %145, %167 : vector<16x32xf32>
    %169 = vector.extract_strided_slice %6 {offsets = [8, 0], sizes = [1, 32], strides = [1, 1]} : vector<10x64xf32> to vector<1x32xf32>
    %170 = vector.extract_strided_slice %6 {offsets = [9, 0], sizes = [1, 32], strides = [1, 1]} : vector<10x64xf32> to vector<1x32xf32>
    %cst_56 = arith.constant dense<0.000000e+00> : vector<16xf32>
    %171 = vector.multi_reduction <add>, %168, %cst_56 [1] : vector<16x32xf32> to vector<16xf32>
    %172 = vector.shape_cast %171 : vector<16xf32> to vector<16x1xf32>
    %cst_57 = arith.constant 3.200000e+01 : f32
    %173 = vector.broadcast %cst_57 : f32 to vector<16x1xf32>
    %174 = arith.divf %172, %173 : vector<16x1xf32>
    %175 = vector.broadcast %174 : vector<16x1xf32> to vector<16x32xf32>
    %176 = arith.subf %168, %175 : vector<16x32xf32>
    %177 = arith.mulf %176, %176 : vector<16x32xf32>
    %cst_58 = arith.constant dense<0.000000e+00> : vector<16xf32>
    %178 = vector.multi_reduction <add>, %177, %cst_58 [1] : vector<16x32xf32> to vector<16xf32>
    %179 = vector.shape_cast %178 : vector<16xf32> to vector<16x1xf32>
    %cst_59 = arith.constant 3.200000e+01 : f32
    %180 = vector.broadcast %cst_59 : f32 to vector<16x1xf32>
    %181 = arith.divf %179, %180 : vector<16x1xf32>
    %182 = vector.broadcast %174 : vector<16x1xf32> to vector<16x32xf32>
    %183 = arith.subf %168, %182 : vector<16x32xf32>
    %cst_60 = arith.constant 9.99999996E-13 : f32
    %184 = vector.broadcast %cst_60 : f32 to vector<16x1xf32>
    %185 = arith.addf %181, %184 : vector<16x1xf32>
    %186 = math.rsqrt %185 : vector<16x1xf32>
    %187 = vector.broadcast %186 : vector<16x1xf32> to vector<16x32xf32>
    %188 = arith.mulf %183, %187 : vector<16x32xf32>
    %189 = vector.broadcast %169 : vector<1x32xf32> to vector<16x32xf32>
    %190 = arith.mulf %189, %188 : vector<16x32xf32>
    %191 = vector.broadcast %170 : vector<1x32xf32> to vector<16x32xf32>
    %192 = arith.addf %190, %191 : vector<16x32xf32>
    %c0_61 = arith.constant 0 : index
    %c0_62 = arith.constant 0 : index
    %193 = vector.load %arg11[%c0_61, %c0_62] : memref<16x32xf32, #tpu.memory_space<vmem>>, vector<16x32xf32>
    tpu.vector_store %arg11[%c0_61, %c0_62], %192 {strides = array<i32>} : memref<16x32xf32, #tpu.memory_space<vmem>>, vector<16x32xf32>,
    %c1_i32 = arith.constant 1 : i32
    %194 = arith.cmpi eq, %arg1, %c1_i32 : i32
    %195 = arith.extui %194 : i1 to i32
    %c0_i32_63 = arith.constant 0 : i32
    %196 = arith.cmpi ne, %195, %c0_i32_63 : i32
    scf.if %196 {
      %197 = vector.shape_cast %192 : vector<16x32xf32> to vector<2x8x32xf32>
      %198 = vector.extract_strided_slice %0 {offsets = [2, 0], sizes = [1, 32], strides = [1, 1]} : vector<4x32xf32> to vector<1x32xf32>
      %199 = vector.shape_cast %198 : vector<1x32xf32> to vector<1x1x32xf32>
      %200 = vector.broadcast %199 : vector<1x1x32xf32> to vector<2x8x32xf32>
      %201 = arith.mulf %197, %200 : vector<2x8x32xf32>
      %cst_64 = arith.constant dense<0.000000e+00> : vector<2x8xf32>
      %202 = vector.multi_reduction <add>, %201, %cst_64 [2] : vector<2x8x32xf32> to vector<2x8xf32>
      %203 = vector.extract_strided_slice %0 {offsets = [3, 0], sizes = [1, 1], strides = [1, 1]} : vector<4x32xf32> to vector<1x1xf32>
      %204 = vector.broadcast %203 : vector<1x1xf32> to vector<2x8xf32>
      %205 = arith.addf %202, %204 : vector<2x8xf32>
      %206 = vector.shape_cast %205 : vector<2x8xf32> to vector<2x1x8xf32>
      %c0_65 = arith.constant 0 : index
      %c0_66 = arith.constant 0 : index
      %c0_67 = arith.constant 0 : index
      %207 = vector.load %arg10[%c0_65, %c0_66, %c0_67] : memref<2x1x8xf32, #tpu.memory_space<vmem>>, vector<2x1x8xf32>
      tpu.vector_store %arg10[%c0_65, %c0_66, %c0_67], %206 {strides = array<i32>} : memref<2x1x8xf32, #tpu.memory_space<vmem>>, vector<2x1x8xf32>,
    } else {
    }
    return
  }
  func.func @transform_0(%arg0: i32, %arg1: i32) -> (i32, i32, i32) {
    %c0_i32 = arith.constant 0 : i32
    %c0_i32_0 = arith.constant 0 : i32
    %c0_i32_1 = arith.constant 0 : i32
    return %arg0, %c0_i32, %c0_i32_0 : i32, i32, i32
  }
  func.func @transform_1(%arg0: i32, %arg1: i32) -> (i32, i32, i32) {
    %c0_i32 = arith.constant 0 : i32
    %c0_i32_0 = arith.constant 0 : i32
    %c0_i32_1 = arith.constant 0 : i32
    return %arg0, %c0_i32, %c0_i32_0 : i32, i32, i32
  }
  func.func @transform_2(%arg0: i32, %arg1: i32) -> (i32, i32, i32) {
    %c0_i32 = arith.constant 0 : i32
    %c0_i32_0 = arith.constant 0 : i32
    %c0_i32_1 = arith.constant 0 : i32
    return %arg1, %c0_i32, %c0_i32_0 : i32, i32, i32
  }
  func.func @transform_3(%arg0: i32, %arg1: i32) -> (i32, i32, i32) {
    %c0_i32 = arith.constant 0 : i32
    %c0_i32_0 = arith.constant 0 : i32
    %c0_i32_1 = arith.constant 0 : i32
    return %arg1, %c0_i32, %c0_i32_0 : i32, i32, i32
  }
  func.func @transform_4(%arg0: i32, %arg1: i32) -> (i32, i32, i32) {
    %c0_i32 = arith.constant 0 : i32
    %c0_i32_0 = arith.constant 0 : i32
    %c0_i32_1 = arith.constant 0 : i32
    return %arg1, %c0_i32, %c0_i32_0 : i32, i32, i32
  }
  func.func @transform_5(%arg0: i32, %arg1: i32) -> (i32, i32, i32) {
    %c0_i32 = arith.constant 0 : i32
    %c0_i32_0 = arith.constant 0 : i32
    %c0_i32_1 = arith.constant 0 : i32
    return %arg1, %c0_i32, %c0_i32_0 : i32, i32, i32
  }
  func.func @transform_6(%arg0: i32, %arg1: i32) -> (i32, i32, i32) {
    %c0_i32 = arith.constant 0 : i32
    %c0_i32_0 = arith.constant 0 : i32
    %c0_i32_1 = arith.constant 0 : i32
    return %arg1, %c0_i32, %c0_i32_0 : i32, i32, i32
  }
  func.func @transform_7(%arg0: i32, %arg1: i32) -> (i32, i32) {
    %c0_i32 = arith.constant 0 : i32
    %c0_i32_0 = arith.constant 0 : i32
    %c0_i32_1 = arith.constant 0 : i32
    return %c0_i32, %c0_i32_0 : i32, i32
  }
  func.func @transform_8(%arg0: i32, %arg1: i32) -> (i32, i32, i32) {
    %c0_i32 = arith.constant 0 : i32
    %c0_i32_0 = arith.constant 0 : i32
    %c0_i32_1 = arith.constant 0 : i32
    return %arg0, %c0_i32, %c0_i32_0 : i32, i32, i32
  }
}

</mosaic_0001>

<llo_original>
// kernel: discriminator_forward.1
$region0: #{discriminator_forward.1}
  #allocation0 [shape = 'u32[]', space=smem, size = 0x4, offset = 0x4, fixed_abs, tag = 'smem constant byte address 0x4 - core index']
  #allocation1 [shape = 'u32[72,128]{1,0:T(1,128)}', space=vmem, size = 0x9000, scoped, tag = 'internal scratch']
  #allocation2 [shape = 'f32[16,32]{1,0:T(8,128)}', space=vmem, size = 0x2000, scoped, tag = 'scratch operand']
  #allocation3 [shape = 'bf16[16,32]{1,0:T(8,128)(2,1)}', space=vmem, size = 0x1000, scoped, tag = 'scratch operand']
  %s0 = inlined_call_operand.vmem [shape: f32[2,8,32], index: 0, kind: input, shape index: {}]
  %s1 = inlined_call_operand.vmem [shape: f32[2,1,8], index: 1, kind: input, shape index: {}]
  %s2 = inlined_call_operand.vmem [shape: bf16[2,32,96], index: 2, kind: input, shape index: {}]
  %s3 = inlined_call_operand.vmem [shape: bf16[2,32,32], index: 3, kind: input, shape index: {}]
  %s4 = inlined_call_operand.vmem [shape: bf16[2,32,64], index: 4, kind: input, shape index: {}]
  %s5 = inlined_call_operand.vmem [shape: bf16[2,64,32], index: 5, kind: input, shape index: {}]
  %s6 = inlined_call_operand.vmem [shape: f32[2,10,64], index: 6, kind: input, shape index: {}]
  %s7 = inlined_call_operand.vmem [shape: f32[4,32], index: 7, kind: input, shape index: {}]
  %s8 = inlined_call_operand.hbm [shape: f32[2,1,8], index: 8, kind: output, shape index: {}]
  %s9 = sld [smem:[#allocation0]]
  $region73: #{discriminator_forward.1} parent=0
    _
  %s11 = ssub.s32 1, %s9
  %s12 = scalar_select 0, %s11, %s9
  $region1: #{discriminator_forward.1} parent=0
    #allocation4 [shape = 'u8[1024]{0}', space=vmem, size = 0x400, scoped, tag = 'output window, operand 0, single buffered']
    #allocation5 [shape = 's32[2]{0}', space=sflag, size = 0x8, scoped, tag = 'scoped memory for discriminator_forward.1']
    %13 = vsyncpa [#allocation5], 0
    loop: start=0, step=1, limit=4
    $region2: #{discriminator_forward.1} parent=1 // loop_pre_header
      _
    $region3: #{discriminator_forward.1} parent=1 // loop_header
      %s15 = sphi 0, %s19
      %p16 = scmp.ge.s32.totalorder %s15, 4
      %s22 = sphi 0, %s34
      %s23 = sphi 0, %s30
      %s24 = sphi 0, %s22
      %s25 = sphi 0, %s23
      %s26 = sphi 0, %s24
      %s27 = sphi 0, %s25
      %s37 = sphi 0, %s39
      %s40 = sphi 0, %s37
      %s41 = sphi 0, %s40
      %s57 = sphi 0, %s41
      %s63 = sphi 0, %s65
      %s66 = sphi 0, %s63
      %s67 = sphi 0, %s66
      %s83 = sphi 0, %s67
      %s89 = sphi 0, %s91
      %s92 = sphi 0, %s89
      %s93 = sphi 0, %s92
      %s109 = sphi 0, %s93
      %s115 = sphi 0, %s117
      %s118 = sphi 0, %s115
      %s119 = sphi 0, %s118
      %s135 = sphi 0, %s119
      %s141 = sphi 0, %s143
      %s144 = sphi 0, %s141
      %s145 = sphi 0, %s144
      %s161 = sphi 0, %s145
      %s167 = sphi 0, %s169
      %s170 = sphi 0, %s167
      %s171 = sphi 0, %s170
      %s187 = sphi 0, %s171
      %s193 = sphi 0, %s195
      %s196 = sphi 0, %s193
      %s197 = sphi 0, %s196
      %s213 = sphi 0, %s197
      %s217 = sphi 0, %s217
      %s219 = sphi 0, %s217
      %s220 = sphi 0, %s219
      %s234 = sphi 0, %s220
      %s240 = sphi 0, %s242
      %s243 = sphi 0, %s240
      %s244 = sphi 0, %s243
      %s260 = sphi 0, %s244
    $region4: #{discriminator_forward.1} parent=1 // loop_header_branch
      %18 = sbr.rel (%p16) target = $region8
    $region5: #{discriminator_forward.1} parent=1 // loop_body
      %s20 = ssub.s32 %s15, 1
      %s21 = ssub.s32 %s15, 2
      %s28 = sadd.s32 1, %s23
      %p29 = scmp.ge.s32.totalorder %s28, 2
      %s30 = scalar_select %p29, 0, %s28
      %s31 = sadd.s32 1, %s22
      %s32 = scalar_select %p29, %s31, %s22
      %p33 = scmp.ge.s32.totalorder %s32, 1
      %s34 = scalar_select %p33, 0, %s32
      %s35 = ssub.s32 %s22, %s34
      %p36 = scmp.eq.s32.totalorder %s35, 0
      %s38 = sadd.s32 %s37, 1
      %s39 = scalar_select %p36, %s37, %s38
      %p42 = pneg %p36
      %p43 = scmp.eq.s32.totalorder %s15, 1
      %p44 = por %p42, %p43
      %p45 = scmp.ne.s32.totalorder %s37, %s40
      %p46 = scmp.eq.s32.totalorder %s15, 0
      %p47 = por %p45, %p46
      %p48 = scmp.ne.s32.totalorder %s37, %s40
      %p49 = scmp.eq.s32.totalorder %s20, 1
      %p50 = por %p48, %p49
      %p51 = scmp.ne.s32.totalorder %s40, %s41
      %p52 = scmp.eq.s32.totalorder %s20, 0
      %p53 = por %p51, %p52
      %p54 = scmp.ne.s32.totalorder %s40, %s41
      %p55 = scmp.eq.s32.totalorder %s21, 1
      %p56 = por %p54, %p55
      %p58 = scmp.ne.s32.totalorder %s41, %s57
      %p59 = scmp.eq.s32.totalorder %s21, 0
      %p60 = por %p58, %p59
      %s61 = ssub.s32 %s22, %s34
      %p62 = scmp.eq.s32.totalorder %s61, 0
      %s64 = sadd.s32 %s63, 1
      %s65 = scalar_select %p62, %s63, %s64
      %p68 = pneg %p62
      %p69 = scmp.eq.s32.totalorder %s15, 1
      %p70 = por %p68, %p69
      %p71 = scmp.ne.s32.totalorder %s63, %s66
      %p72 = scmp.eq.s32.totalorder %s15, 0
      %p73 = por %p71, %p72
      %p74 = scmp.ne.s32.totalorder %s63, %s66
      %p75 = scmp.eq.s32.totalorder %s20, 1
      %p76 = por %p74, %p75
      %p77 = scmp.ne.s32.totalorder %s66, %s67
      %p78 = scmp.eq.s32.totalorder %s20, 0
      %p79 = por %p77, %p78
      %p80 = scmp.ne.s32.totalorder %s66, %s67
      %p81 = scmp.eq.s32.totalorder %s21, 1
      %p82 = por %p80, %p81
      %p84 = scmp.ne.s32.totalorder %s67, %s83
      %p85 = scmp.eq.s32.totalorder %s21, 0
      %p86 = por %p84, %p85
      %s87 = ssub.s32 %s23, %s30
      %p88 = scmp.eq.s32.totalorder %s87, 0
      %s90 = sadd.s32 %s89, 1
      %s91 = scalar_select %p88, %s89, %s90
      %p94 = pneg %p88
      %p95 = scmp.eq.s32.totalorder %s15, 1
      %p96 = por %p94, %p95
      %p97 = scmp.ne.s32.totalorder %s89, %s92
      %p98 = scmp.eq.s32.totalorder %s15, 0
      %p99 = por %p97, %p98
      %p100 = scmp.ne.s32.totalorder %s89, %s92
      %p101 = scmp.eq.s32.totalorder %s20, 1
      %p102 = por %p100, %p101
      %p103 = scmp.ne.s32.totalorder %s92, %s93
      %p104 = scmp.eq.s32.totalorder %s20, 0
      %p105 = por %p103, %p104
      %p106 = scmp.ne.s32.totalorder %s92, %s93
      %p107 = scmp.eq.s32.totalorder %s21, 1
      %p108 = por %p106, %p107
      %p110 = scmp.ne.s32.totalorder %s93, %s109
      %p111 = scmp.eq.s32.totalorder %s21, 0
      %p112 = por %p110, %p111
      %s113 = ssub.s32 %s23, %s30
      %p114 = scmp.eq.s32.totalorder %s113, 0
      %s116 = sadd.s32 %s115, 1
      %s117 = scalar_select %p114, %s115, %s116
      %p120 = pneg %p114
      %p121 = scmp.eq.s32.totalorder %s15, 1
      %p122 = por %p120, %p121
      %p123 = scmp.ne.s32.totalorder %s115, %s118
      %p124 = scmp.eq.s32.totalorder %s15, 0
      %p125 = por %p123, %p124
      %p126 = scmp.ne.s32.totalorder %s115, %s118
      %p127 = scmp.eq.s32.totalorder %s20, 1
      %p128 = por %p126, %p127
      %p129 = scmp.ne.s32.totalorder %s118, %s119
      %p130 = scmp.eq.s32.totalorder %s20, 0
      %p131 = por %p129, %p130
      %p132 = scmp.ne.s32.totalorder %s118, %s119
      %p133 = scmp.eq.s32.totalorder %s21, 1
      %p134 = por %p132, %p133
      %p136 = scmp.ne.s32.totalorder %s119, %s135
      %p137 = scmp.eq.s32.totalorder %s21, 0
      %p138 = por %p136, %p137
      %s139 = ssub.s32 %s23, %s30
      %p140 = scmp.eq.s32.totalorder %s139, 0
      %s142 = sadd.s32 %s141, 1
      %s143 = scalar_select %p140, %s141, %s142
      %p146 = pneg %p140
      %p147 = scmp.eq.s32.totalorder %s15, 1
      %p148 = por %p146, %p147
      %p149 = scmp.ne.s32.totalorder %s141, %s144
      %p150 = scmp.eq.s32.totalorder %s15, 0
      %p151 = por %p149, %p150
      %p152 = scmp.ne.s32.totalorder %s141, %s144
      %p153 = scmp.eq.s32.totalorder %s20, 1
      %p154 = por %p152, %p153
      %p155 = scmp.ne.s32.totalorder %s144, %s145
      %p156 = scmp.eq.s32.totalorder %s20, 0
      %p157 = por %p155, %p156
      %p158 = scmp.ne.s32.totalorder %s144, %s145
      %p159 = scmp.eq.s32.totalorder %s21, 1
      %p160 = por %p158, %p159
      %p162 = scmp.ne.s32.totalorder %s145, %s161
      %p163 = scmp.eq.s32.totalorder %s21, 0
      %p164 = por %p162, %p163
      %s165 = ssub.s32 %s23, %s30
      %p166 = scmp.eq.s32.totalorder %s165, 0
      %s168 = sadd.s32 %s167, 1
      %s169 = scalar_select %p166, %s167, %s168
      %p172 = pneg %p166
      %p173 = scmp.eq.s32.totalorder %s15, 1
      %p174 = por %p172, %p173
      %p175 = scmp.ne.s32.totalorder %s167, %s170
      %p176 = scmp.eq.s32.totalorder %s15, 0
      %p177 = por %p175, %p176
      %p178 = scmp.ne.s32.totalorder %s167, %s170
      %p179 = scmp.eq.s32.totalorder %s20, 1
      %p180 = por %p178, %p179
      %p181 = scmp.ne.s32.totalorder %s170, %s171
      %p182 = scmp.eq.s32.totalorder %s20, 0
      %p183 = por %p181, %p182
      %p184 = scmp.ne.s32.totalorder %s170, %s171
      %p185 = scmp.eq.s32.totalorder %s21, 1
      %p186 = por %p184, %p185
      %p188 = scmp.ne.s32.totalorder %s171, %s187
      %p189 = scmp.eq.s32.totalorder %s21, 0
      %p190 = por %p188, %p189
      %s191 = ssub.s32 %s23, %s30
      %p192 = scmp.eq.s32.totalorder %s191, 0
      %s194 = sadd.s32 %s193, 1
      %s195 = scalar_select %p192, %s193, %s194
      %p198 = pneg %p192
      %p199 = scmp.eq.s32.totalorder %s15, 1
      %p200 = por %p198, %p199
      %p201 = scmp.ne.s32.totalorder %s193, %s196
      %p202 = scmp.eq.s32.totalorder %s15, 0
      %p203 = por %p201, %p202
      %p204 = scmp.ne.s32.totalorder %s193, %s196
      %p205 = scmp.eq.s32.totalorder %s20, 1
      %p206 = por %p204, %p205
      %p207 = scmp.ne.s32.totalorder %s196, %s197
      %p208 = scmp.eq.s32.totalorder %s20, 0
      %p209 = por %p207, %p208
      %p210 = scmp.ne.s32.totalorder %s196, %s197
      %p211 = scmp.eq.s32.totalorder %s21, 1
      %p212 = por %p210, %p211
      %p214 = scmp.ne.s32.totalorder %s197, %s213
      %p215 = scmp.eq.s32.totalorder %s21, 0
      %p216 = por %p214, %p215
      %s218 = sadd.s32 %s217, 1
      %p221 = scmp.eq.s32.totalorder %s15, 1
      %p222 = scmp.ne.s32.totalorder %s217, %s219
      %p223 = scmp.eq.s32.totalorder %s15, 0
      %p224 = por %p222, %p223
      %p225 = scmp.ne.s32.totalorder %s217, %s219
      %p226 = scmp.eq.s32.totalorder %s20, 1
      %p227 = por %p225, %p226
      %p228 = scmp.ne.s32.totalorder %s219, %s220
      %p229 = scmp.eq.s32.totalorder %s20, 0
      %p230 = por %p228, %p229
      %p231 = scmp.ne.s32.totalorder %s219, %s220
      %p232 = scmp.eq.s32.totalorder %s21, 1
      %p233 = por %p231, %p232
      %p235 = scmp.ne.s32.totalorder %s220, %s234
      %p236 = scmp.eq.s32.totalorder %s21, 0
      %p237 = por %p235, %p236
      %s238 = ssub.s32 %s22, %s34
      %p239 = scmp.eq.s32.totalorder %s238, 0
      %s241 = sadd.s32 %s240, 1
      %s242 = scalar_select %p239, %s240, %s241
      %p245 = pneg %p239
      %p246 = scmp.eq.s32.totalorder %s15, 1
      %p247 = por %p245, %p246
      %p248 = scmp.ne.s32.totalorder %s240, %s243
      %p249 = scmp.eq.s32.totalorder %s15, 0
      %p250 = por %p248, %p249
      %p251 = scmp.ne.s32.totalorder %s240, %s243
      %p252 = scmp.eq.s32.totalorder %s20, 1
      %p253 = por %p251, %p252
      %p254 = scmp.ne.s32.totalorder %s243, %s244
      %p255 = scmp.eq.s32.totalorder %s20, 0
      %p256 = por %p254, %p255
      %p257 = scmp.ne.s32.totalorder %s243, %s244
      %p258 = scmp.eq.s32.totalorder %s21, 1
      %p259 = por %p257, %p258
      %p261 = scmp.ne.s32.totalorder %s244, %s260
      %p262 = scmp.eq.s32.totalorder %s21, 0
      %p263 = por %p261, %p262
      %p264 = scmp.le.s32.totalorder 1, %s15
      %p265 = scmp.lt.s32.totalorder %s15, 3
      %p266 = pnand %p264, %p265
      %p267 = pneg %p266
      // Predicated region
      $region9: #{discriminator_forward.1} parent=5 // pred_check
        _
      $region10: #{discriminator_forward.1} parent=5 // pred_check_branch
        %269 = sbr.rel (%p266) target = $region12
      $region11: #{discriminator_forward.1} parent=5 // pred_region
        %s270 = ssub.s32 %s15, 1
        // Predicated region
        $region13: #{discriminator_forward.1} parent=11 // pred_check
          %p271 = pneg %p53
        $region14: #{discriminator_forward.1} parent=11 // pred_check_branch
          %273 = sbr.rel (%p271) target = $region16
        $region15: #{discriminator_forward.1} parent=11 // pred_region
          %s274 = smul.u32 2, %s24
          %p275 = scmp.lt.s32.totalorder %s274, 1
          %s276 = scalar_select %p275, %s274, 1
          %s277 = smul.addr %s276, 8
          %s278 = scalar_lea.vmem %s0, %s277
          %s279 = smul.u32 2, %s24
        $region16: #{discriminator_forward.1} parent=11 // pred_fallthru
          _
        // Predicated region
        $region17: #{discriminator_forward.1} parent=11 // pred_check
          %p280 = pneg %p79
        $region18: #{discriminator_forward.1} parent=11 // pred_check_branch
          %282 = sbr.rel (%p280) target = $region20
        $region19: #{discriminator_forward.1} parent=11 // pred_region
          %s283 = smul.u32 2, %s24
          %p284 = scmp.lt.s32.totalorder %s283, 1
          %s285 = scalar_select %p284, %s283, 1
          %s286 = scalar_lea.vmem %s1, %s285
          %s287 = smul.u32 2, %s24
        $region20: #{discriminator_forward.1} parent=11 // pred_fallthru
          _
        // Predicated region
        $region21: #{discriminator_forward.1} parent=11 // pred_check
          %p288 = pneg %p230
        $region22: #{discriminator_forward.1} parent=11 // pred_check_branch
          %290 = sbr.rel (%p288) target = $region24
        $region23: #{discriminator_forward.1} parent=11 // pred_region
          _
        $region24: #{discriminator_forward.1} parent=11 // pred_fallthru
          _
      $region12: #{discriminator_forward.1} parent=5 // pred_fallthru
        _
      %p291 = scmp.lt.s32.totalorder %s15, 2
      // Predicated region
      $region25: #{discriminator_forward.1} parent=5 // pred_check
        %p292 = pneg %p291
      $region26: #{discriminator_forward.1} parent=5 // pred_check_branch
        %294 = sbr.rel (%p292) target = $region28
      $region27: #{discriminator_forward.1} parent=5 // pred_region
        // Predicated region
        $region29: #{discriminator_forward.1} parent=27 // pred_check
          %p295 = pneg %p99
        $region30: #{discriminator_forward.1} parent=27 // pred_check_branch
          %297 = sbr.rel (%p295) target = $region32
        $region31: #{discriminator_forward.1} parent=27 // pred_region
          %p298 = scmp.lt.s32.totalorder %s23, 1
          %s299 = scalar_select %p298, %s23, 1
          %s300 = smul.addr %s299, 4
          %s301 = smul.addr %s300, 4
          %s302 = scalar_lea.vmem %s2, %s301
        $region32: #{discriminator_forward.1} parent=27 // pred_fallthru
          _
        // Predicated region
        $region33: #{discriminator_forward.1} parent=27 // pred_check
          %p303 = pneg %p125
        $region34: #{discriminator_forward.1} parent=27 // pred_check_branch
          %305 = sbr.rel (%p303) target = $region36
        $region35: #{discriminator_forward.1} parent=27 // pred_region
          %p306 = scmp.lt.s32.totalorder %s23, 1
          %s307 = scalar_select %p306, %s23, 1
          %s308 = smul.addr %s307, 4
          %s309 = smul.addr %s308, 4
          %s310 = scalar_lea.vmem %s3, %s309
        $region36: #{discriminator_forward.1} parent=27 // pred_fallthru
          _
        // Predicated region
        $region37: #{discriminator_forward.1} parent=27 // pred_check
          %p311 = pneg %p151
        $region38: #{discriminator_forward.1} parent=27 // pred_check_branch
          %313 = sbr.rel (%p311) target = $region40
        $region39: #{discriminator_forward.1} parent=27 // pred_region
          %p314 = scmp.lt.s32.totalorder %s23, 1
          %s315 = scalar_select %p314, %s23, 1
          %s316 = smul.addr %s315, 4
          %s317 = smul.addr %s316, 4
          %s318 = scalar_lea.vmem %s4, %s317
        $region40: #{discriminator_forward.1} parent=27 // pred_fallthru
          _
        // Predicated region
        $region41: #{discriminator_forward.1} parent=27 // pred_check
          %p319 = pneg %p177
        $region42: #{discriminator_forward.1} parent=27 // pred_check_branch
          %321 = sbr.rel (%p319) target = $region44
        $region43: #{discriminator_forward.1} parent=27 // pred_region
          %p322 = scmp.lt.s32.totalorder %s23, 1
          %s323 = scalar_select %p322, %s23, 1
          %s324 = smul.addr %s323, 8
          %s325 = smul.addr %s324, 4
          %s326 = scalar_lea.vmem %s5, %s325
        $region44: #{discriminator_forward.1} parent=27 // pred_fallthru
          _
        // Predicated region
        $region45: #{discriminator_forward.1} parent=27 // pred_check
          %p327 = pneg %p203
        $region46: #{discriminator_forward.1} parent=27 // pred_check_branch
          %329 = sbr.rel (%p327) target = $region48
        $region47: #{discriminator_forward.1} parent=27 // pred_region
          %p330 = scmp.lt.s32.totalorder %s23, 1
          %s331 = scalar_select %p330, %s23, 1
          %s332 = smul.addr %s331, 2
          %s333 = smul.addr %s332, 8
          %s334 = scalar_lea.vmem %s6, %s333
        $region48: #{discriminator_forward.1} parent=27 // pred_fallthru
          _
      $region28: #{discriminator_forward.1} parent=5 // pred_fallthru
        _
      %p335 = scmp.le.s32.totalorder 1, %s15
      %p336 = scmp.lt.s32.totalorder %s15, 3
      %p337 = pnand %p335, %p336
      %p338 = pneg %p337
      // Predicated region
      $region49: #{discriminator_forward.1} parent=5 // pred_check
        _
      $region50: #{discriminator_forward.1} parent=5 // pred_check_branch
        %340 = sbr.rel (%p337) target = $region52
      $region51: #{discriminator_forward.1} parent=5 // pred_region
        %s341 = ssub.s32 %s15, 1
        %s342 = smul.u32 2, %s24
        %p343 = scmp.lt.s32.totalorder %s342, 1
        %s344 = scalar_select %p343, %s342, 1
        %s345 = smul.addr %s344, 8
        %s346 = scalar_lea.vmem %s0, %s345
        %p347 = pneg %p53
        %p348 = pneg %p50
        %s349 = smul.u32 2, %s24
        %p350 = scmp.lt.s32.totalorder %s349, 1
        %s351 = scalar_select %p350, %s349, 1
        %s352 = scalar_lea.vmem %s1, %s351
        %p353 = pneg %p79
        %p354 = pneg %p76
        %p355 = scmp.lt.s32.totalorder %s25, 1
        %s356 = scalar_select %p355, %s25, 1
        %s357 = smul.addr %s356, 4
        %s358 = smul.addr %s357, 4
        %s359 = scalar_lea.vmem %s2, %s358
        %p360 = pneg %p105
        %p361 = pneg %p102
        %p362 = scmp.lt.s32.totalorder %s25, 1
        %s363 = scalar_select %p362, %s25, 1
        %s364 = smul.addr %s363, 4
        %s365 = smul.addr %s364, 4
        %s366 = scalar_lea.vmem %s3, %s365
        %p367 = pneg %p131
        %p368 = pneg %p128
        %p369 = scmp.lt.s32.totalorder %s25, 1
        %s370 = scalar_select %p369, %s25, 1
        %s371 = smul.addr %s370, 4
        %s372 = smul.addr %s371, 4
        %s373 = scalar_lea.vmem %s4, %s372
        %p374 = pneg %p157
        %p375 = pneg %p154
        %p376 = scmp.lt.s32.totalorder %s25, 1
        %s377 = scalar_select %p376, %s25, 1
        %s378 = smul.addr %s377, 8
        %s379 = smul.addr %s378, 4
        %s380 = scalar_lea.vmem %s5, %s379
        %p381 = pneg %p183
        %p382 = pneg %p180
        %p383 = scmp.lt.s32.totalorder %s25, 1
        %s384 = scalar_select %p383, %s25, 1
        %s385 = smul.addr %s384, 2
        %s386 = smul.addr %s385, 8
        %s387 = scalar_lea.vmem %s6, %s386
        %p388 = pneg %p209
        %p389 = pneg %p206
        %p390 = pneg %p230
        %p391 = pneg %p227
        %p392 = pneg %p256
        %p393 = pneg %p253
        %s394 = smul.u32 2, %s24
        %p395 = scmp.lt.s32.totalorder %s394, 1
        %s396 = scalar_select %p395, %s394, 1
        %s397 = smul.addr %s396, 8
        %s398 = scalar_lea.vmem %s0, %s397
        %s399 = smul.u32 2, %s24
        %s400 = smul.u32 2, %s24
        %p401 = scmp.lt.s32.totalorder %s400, 1
        %s402 = scalar_select %p401, %s400, 1
        %s403 = scalar_lea.vmem %s1, %s402
        %s404 = smul.u32 2, %s24
        %p405 = scmp.lt.s32.totalorder %s25, 1
        %s406 = scalar_select %p405, %s25, 1
        %s407 = smul.addr %s406, 4
        %s408 = smul.addr %s407, 4
        %s409 = scalar_lea.vmem %s2, %s408
        %p410 = scmp.lt.s32.totalorder %s25, 1
        %s411 = scalar_select %p410, %s25, 1
        %s412 = smul.addr %s411, 4
        %s413 = smul.addr %s412, 4
        %s414 = scalar_lea.vmem %s3, %s413
        %p415 = scmp.lt.s32.totalorder %s25, 1
        %s416 = scalar_select %p415, %s25, 1
        %s417 = smul.addr %s416, 4
        %s418 = smul.addr %s417, 4
        %s419 = scalar_lea.vmem %s4, %s418
        %p420 = scmp.lt.s32.totalorder %s25, 1
        %s421 = scalar_select %p420, %s25, 1
        %s422 = smul.addr %s421, 8
        %s423 = smul.addr %s422, 4
        %s424 = scalar_lea.vmem %s5, %s423
        %p425 = scmp.lt.s32.totalorder %s25, 1
        %s426 = scalar_select %p425, %s25, 1
        %s427 = smul.addr %s426, 2
        %s428 = smul.addr %s427, 8
        %s429 = scalar_lea.vmem %s6, %s428
        %s430 = smul.u32 2, %s24
        %v432 = vld [vmem:[%s7] sm:$0xf]
        %p433 = scmp.eq.s32.totalorder %s25, 0
        // Predicated region
        $region53: #{discriminator_forward.1} parent=51 // pred_check
          %p434 = pneg %p433
        $region54: #{discriminator_forward.1} parent=51 // pred_check_branch
          %436 = sbr.rel (%p434) target = $region56
        $region55: #{discriminator_forward.1} parent=51 // pred_region
          %v437 = vld [vmem:[%s398] sm:$0xff]
          %v438 = vld [vmem:[%s398 + $0x8] sm:$0xff]
          %vm439 = vcmask 261120
          %v440 = vsel %vm439, %v437, 0.0
          %441 = vadd.xlane.f32.xlu0 %v440
          %v442 = vpop.xlane.xlu0 %441
          %v443 = vsel %vm439, %v438, 0.0
          %444 = vadd.xlane.f32.xlu0 %v443
          %v445 = vpop.xlane.xlu0 %444
          %v446 = vrcp.pop 32.0
          %v447 = vmul.f32 32.0, %v446
          %v448 = vsub.f32 1.0, %v447
          %v449 = vmul.f32 %v446, %v448
          %v450 = vadd.f32 %v446, %v449
          %vm451 = vweird.f32 %v446
          %v452 = vsel %vm451, %v446, %v450
          %v453 = vmul.f32 %v442, %v452
          %v454 = vmul.f32 %v445, %v452
          %v455 = vsub.f32 %v437, %v453
          %v456 = vsub.f32 %v438, %v454
          %v457 = vmul.f32 %v455, %v455
          %v458 = vmul.f32 %v456, %v456
          %v459 = vsel %vm439, %v457, 0.0
          %460 = vadd.xlane.f32.xlu0 %v459
          %v461 = vpop.xlane.xlu0 %460
          %v462 = vsel %vm439, %v458, 0.0
          %463 = vadd.xlane.f32.xlu0 %v462
          %v464 = vpop.xlane.xlu0 %463
          %v465 = vmul.f32 %v461, %v452
          %v466 = vmul.f32 %v464, %v452
          %v467 = vadd.f32 %v465, 1e-12
          %v468 = vadd.f32 %v466, 1e-12
          %v469 = vrsqrt.pop %v467
          %v470 = vmul.f32 %v469, %v467
          %v471 = vmul.f32 %v470, %v469
          %v472 = vmul.f32 0.5, %v471
          %v473 = vsub.f32 1.5, %v472
          %v474 = vmul.f32 %v469, %v473
          %vm475 = vweird.f32 %v467
          %vm476 = vweird.f32 %v469
          %vm477 = vmor %vm475, %vm476
          %v478 = vsel %vm477, %v469, %v474
          %v479 = vrsqrt.pop %v468
          %v480 = vmul.f32 %v479, %v468
          %v481 = vmul.f32 %v480, %v479
          %v482 = vmul.f32 0.5, %v481
          %v483 = vsub.f32 1.5, %v482
          %v484 = vmul.f32 %v479, %v483
          %vm485 = vweird.f32 %v468
          %vm486 = vweird.f32 %v479
          %vm487 = vmor %vm485, %vm486
          %v488 = vsel %vm487, %v479, %v484
          %v489 = vmul.f32 %v455, %v478
          %v490 = vmul.f32 %v456, %v488
          %v491 = vperm.slane %v432, 0
          %v492 = vmul.f32 %v491, %v489
          %v493 = vmul.f32 %v491, %v490
          %v494 = vperm.slane %v432, 1
          %v495 = vadd.f32 %v492, %v494
          %v496 = vadd.f32 %v493, %v494
          %497 = vst.msk [vmem:[#allocation2] sm:$0xff] %vm439, %v495
          %498 = vst.msk [vmem:[#allocation2 + $0x8] sm:$0xff] %vm439, %v496
        $region56: #{discriminator_forward.1} parent=51 // pred_fallthru
          _
        %v499 = vld [vmem:[#allocation2] sm:$0xff]
        %v500 = vld [vmem:[#allocation2 + $0x8] sm:$0xff]
        %v501 = vld [vmem:[%s429] sm:$0xff]
        %v502 = vld [vmem:[%s429 + $0x8] sm:$0x3]
        %v503 = vld [vmem:[%s409] sm:$0xf]
        %v504 = vld [vmem:[%s409 + $0x4] sm:$0xf]
        %v505 = vld [vmem:[%s409 + $0x8] sm:$0xf]
        %v506 = vld [vmem:[%s409 + $0xc] sm:$0xf]
        %v507 = vpack.c.bf16 %v500, %v499
        %v512 = vunpack.c.l.b16 %v503
        %v513 = vunpack.c.l.b16 %v504
        %v514 = vunpack.c.l.b16 %v505
        %v515 = vunpack.c.l.b16 %v506
        %v516 = vpack.c.b16 %v513, %v512
        %v517 = vpack.c.b16 %v515, %v514
        %vm520 = vcmask 261120
        %v522 = vsel %vm520, %v507, 0
        %524 = vmatpush.bf16.msra.mxu0 0
        %525 = vmatpush.bf16.msra.mxu0 0
        %526 = vmatpush.bf16.msra.mxu0 0
        %527 = vmatpush.bf16.msra.mxu0 0
        %528 = vmatpush.bf16.msra.mxu0 0
        %529 = vmatpush.bf16.msra.mxu0 0
        %530 = vmatpush.bf16.msra.mxu0 %v517
        %531 = vmatpush.bf16.msra.mxu0 %v516
        %532 = vmatmul.bf16.gmra.mxu0 %v522
        %v533 = vpop.f32.mrf.mxu0
        %v534 = vadd.f32 0.0, %v533
        %v535 = vpop.f32.mrf.mxu0
        %v536 = vadd.f32 0.0, %v535
        %537 = vdwg.mxu0
        %v538 = vperm.slane %v501, 0
        %v539 = vadd.f32 %v534, %v538
        %v540 = vadd.f32 %v536, %v538
        %v541 = vpack.c.bf16 %v539, %v539
        %v542 = vpack.c.bf16 %v540, %v540
        %v543 = vperm.slane %v501, 1
        %545 = vrot.lane.b32.xlu0 %v543, 32
        %v546 = vpop.permute.xlu0 %545
        %v548 = vadd.f32 %v534, %v546
        %v549 = vadd.f32 %v536, %v546
        %v550 = vpack.c.bf16 %v548, %v548
        %v551 = vpack.c.bf16 %v549, %v549
        %v552 = vperm.slane %v501, 2
        %554 = vrot.lane.b32.xlu0 %v552, 64
        %v555 = vpop.permute.xlu0 %554
        %v557 = vadd.f32 %v534, %v555
        %v558 = vadd.f32 %v536, %v555
        %v559 = vpack.c.bf16 %v557, %v557
        %v560 = vpack.c.bf16 %v558, %v558
        %v561 = vld [vmem:[%s403] sm:$0x1]
        %v562 = vld [vmem:[%s403 + $0x1] sm:$0x1]
        %v565 = vperm.slane %v561, 0
        %v566 = vperm.slane %v562, 0
        %v570 = vunpack.c.l.b16 %v550
        %v571 = vpack.c.b16 %v570, %v570
        %572 = vrot.lane.b32.xlu0 %v571, 96
        %v573 = vpop.permute.xlu0 %572
        %vm574 = vcmask 64512
        %v576 = vsel %vm574, %v541, 0
        %v579 = vsel %vm574, %v573, 0
        %581 = vmatpush.bf16.xpose.msra.mxu0 0
        %582 = vmatpush.bf16.xpose.msra.mxu0 0
        %583 = vmatpush.bf16.xpose.msra.mxu0 0
        %584 = vmatpush.bf16.xpose.msra.mxu0 0
        %585 = vmatpush.bf16.xpose.msra.mxu0 0
        %586 = vmatpush.bf16.xpose.msra.mxu0 0
        %587 = vmatpush.bf16.xpose.msra.mxu0 0
        %588 = vmatpush.bf16.xpose.msra.mxu0 %v579
        %589 = vmatmul.bf16.gmra.mxu0 %v576
        %v590 = vpop.f32.mrf.mxu0
        %v591 = vadd.f32 %v565, %v590
        %v592 = vpop.f32.mrf.mxu0
        %593 = vdwg.mxu0
        %v595 = vunpack.c.l.b16 %v551
        %v596 = vpack.c.b16 %v595, %v595
        %597 = vrot.lane.b32.xlu0 %v596, 96
        %v598 = vpop.permute.xlu0 %597
        %v600 = vsel %vm574, %v542, 0
        %v603 = vsel %vm574, %v598, 0
        %605 = vmatpush.bf16.xpose.msra.mxu0 0
        %606 = vmatpush.bf16.xpose.msra.mxu0 0
        %607 = vmatpush.bf16.xpose.msra.mxu0 0
        %608 = vmatpush.bf16.xpose.msra.mxu0 0
        %609 = vmatpush.bf16.xpose.msra.mxu0 0
        %610 = vmatpush.bf16.xpose.msra.mxu0 0
        %611 = vmatpush.bf16.xpose.msra.mxu0 0
        %612 = vmatpush.bf16.xpose.msra.mxu0 %v603
        %613 = vmatmul.bf16.gmra.mxu0 %v600
        %v614 = vpop.f32.mrf.mxu0
        %v615 = vadd.f32 %v566, %v614
        %v616 = vpop.f32.mrf.mxu0
        %617 = vdwg.mxu0
        %v618 = vsel %vm574, %v591, -inf
        %619 = vmax.xlane.f32.xlu0 %v618
        %v620 = vpop.xlane.xlu0 %619
        %v621 = vsel %vm574, %v615, -inf
        %622 = vmax.xlane.f32.xlu0 %v621
        %v623 = vpop.xlane.xlu0 %622
        %v624 = vsub.f32 %v591, %v620
        %v625 = vsub.f32 %v615, %v623
        %v626 = vmul.f32 %v624, 1.442695
        %v627 = vpow.pop %v626
        %v628 = vmul.f32 %v625, 1.442695
        %v629 = vpow.pop %v628
        %v630 = vsel %vm574, %v627, 0.0
        %631 = vadd.xlane.f32.xlu0 %v630
        %v632 = vpop.xlane.xlu0 %631
        %v633 = vsel %vm574, %v629, 0.0
        %634 = vadd.xlane.f32.xlu0 %v633
        %v635 = vpop.xlane.xlu0 %634
        %v636 = vrcp.pop %v632
        %v637 = vrcp.pop %v635
        %v638 = vmul.f32 %v627, %v636
        %v639 = vmul.f32 %v629, %v637
        %v640 = vpack.c.bf16 %v638, %v638
        %v641 = vpack.c.bf16 %v639, %v639
        %v643 = vunpack.c.l.b16 %v559
        %v644 = vpack.c.b16 %v643, %v643
        %645 = vrot.lane.b32.xlu0 %v644, 64
        %v646 = vpop.permute.xlu0 %645
        %v648 = vsel %vm574, %v640, 0
        %vm650 = vcmask 1043456
        %v652 = vsel %vm650, %v646, 0
        %654 = vmatpush.bf16.msra.mxu0 0
        %655 = vmatpush.bf16.msra.mxu0 0
        %656 = vmatpush.bf16.msra.mxu0 0
        %657 = vmatpush.bf16.msra.mxu0 0
        %658 = vmatpush.bf16.msra.mxu0 0
        %659 = vmatpush.bf16.msra.mxu0 0
        %660 = vmatpush.bf16.msra.mxu0 0
        %661 = vmatpush.bf16.msra.mxu0 %v652
        %662 = vmatmul.bf16.gmra.mxu0 %v648
        %v663 = vpop.f32.mrf.mxu0
        %v664 = vadd.f32 0.0, %v663
        %v665 = vpop.f32.mrf.mxu0
        %666 = vdwg.mxu0
        %v668 = vunpack.c.l.b16 %v560
        %v669 = vpack.c.b16 %v668, %v668
        %670 = vrot.lane.b32.xlu0 %v669, 64
        %v671 = vpop.permute.xlu0 %670
        %v673 = vsel %vm574, %v641, 0
        %v676 = vsel %vm650, %v671, 0
        %678 = vmatpush.bf16.msra.mxu0 0
        %679 = vmatpush.bf16.msra.mxu0 0
        %680 = vmatpush.bf16.msra.mxu0 0
        %681 = vmatpush.bf16.msra.mxu0 0
        %682 = vmatpush.bf16.msra.mxu0 0
        %683 = vmatpush.bf16.msra.mxu0 0
        %684 = vmatpush.bf16.msra.mxu0 0
        %685 = vmatpush.bf16.msra.mxu0 %v676
        %686 = vmatmul.bf16.gmra.mxu0 %v673
        %v687 = vpop.f32.mrf.mxu0
        %v688 = vadd.f32 0.0, %v687
        %v689 = vpop.f32.mrf.mxu0
        %690 = vdwg.mxu0
        %v691 = vpack.c.bf16 %v664, %v664
        %v692 = vpack.c.bf16 %v688, %v688
        %vm693 = vcmask 60416
        %694 = vst.msk [vmem:[#allocation3] sm:$0xf] %vm693, %v691
        %695 = vst.msk [vmem:[#allocation3 + $0x4] sm:$0xf] %vm693, %v692
        %v697 = vunpack.c.l.b16 %v541
        %v698 = vpack.c.b16 %v697, %v697
        %699 = vrot.lane.b32.xlu0 %v698, 120
        %v700 = vpop.permute.xlu0 %699
        %701 = vrot.lane.b32.xlu0 %v571, 88
        %v702 = vpop.permute.xlu0 %701
        %v704 = vsel %vm574, %v700, 0
        %v707 = vsel %vm574, %v702, 0
        %709 = vmatpush.bf16.xpose.msra.mxu0 0
        %710 = vmatpush.bf16.xpose.msra.mxu0 0
        %711 = vmatpush.bf16.xpose.msra.mxu0 0
        %712 = vmatpush.bf16.xpose.msra.mxu0 0
        %713 = vmatpush.bf16.xpose.msra.mxu0 0
        %714 = vmatpush.bf16.xpose.msra.mxu0 0
        %715 = vmatpush.bf16.xpose.msra.mxu0 0
        %716 = vmatpush.bf16.xpose.msra.mxu0 %v707
        %717 = vmatmul.bf16.gmra.mxu0 %v704
        %v718 = vpop.f32.mrf.mxu0
        %v719 = vadd.f32 %v565, %v718
        %v720 = vpop.f32.mrf.mxu0
        %721 = vdwg.mxu0
        %v723 = vunpack.c.l.b16 %v542
        %v724 = vpack.c.b16 %v723, %v723
        %725 = vrot.lane.b32.xlu0 %v724, 120
        %v726 = vpop.permute.xlu0 %725
        %727 = vrot.lane.b32.xlu0 %v596, 88
        %v728 = vpop.permute.xlu0 %727
        %v730 = vsel %vm574, %v726, 0
        %v733 = vsel %vm574, %v728, 0
        %735 = vmatpush.bf16.xpose.msra.mxu0 0
        %736 = vmatpush.bf16.xpose.msra.mxu0 0
        %737 = vmatpush.bf16.xpose.msra.mxu0 0
        %738 = vmatpush.bf16.xpose.msra.mxu0 0
        %739 = vmatpush.bf16.xpose.msra.mxu0 0
        %740 = vmatpush.bf16.xpose.msra.mxu0 0
        %741 = vmatpush.bf16.xpose.msra.mxu0 0
        %742 = vmatpush.bf16.xpose.msra.mxu0 %v733
        %743 = vmatmul.bf16.gmra.mxu0 %v730
        %v744 = vpop.f32.mrf.mxu0
        %v745 = vadd.f32 %v566, %v744
        %v746 = vpop.f32.mrf.mxu0
        %747 = vdwg.mxu0
        %v748 = vsel %vm574, %v719, -inf
        %749 = vmax.xlane.f32.xlu0 %v748
        %v750 = vpop.xlane.xlu0 %749
        %v751 = vsel %vm574, %v745, -inf
        %752 = vmax.xlane.f32.xlu0 %v751
        %v753 = vpop.xlane.xlu0 %752
        %v754 = vsub.f32 %v719, %v750
        %v755 = vsub.f32 %v745, %v753
        %v756 = vmul.f32 %v754, 1.442695
        %v757 = vpow.pop %v756
        %v758 = vmul.f32 %v755, 1.442695
        %v759 = vpow.pop %v758
        %v760 = vsel %vm574, %v757, 0.0
        %761 = vadd.xlane.f32.xlu0 %v760
        %v762 = vpop.xlane.xlu0 %761
        %v763 = vsel %vm574, %v759, 0.0
        %764 = vadd.xlane.f32.xlu0 %v763
        %v765 = vpop.xlane.xlu0 %764
        %v766 = vrcp.pop %v762
        %v767 = vrcp.pop %v765
        %v768 = vmul.f32 %v757, %v766
        %v769 = vmul.f32 %v759, %v767
        %v770 = vpack.c.bf16 %v768, %v768
        %v771 = vpack.c.bf16 %v769, %v769
        %772 = vrot.lane.b32.xlu0 %v644, 56
        %v773 = vpop.permute.xlu0 %772
        %v775 = vsel %vm574, %v770, 0
        %v778 = vsel %vm650, %v773, 0
        %780 = vmatpush.bf16.msra.mxu0 0
        %781 = vmatpush.bf16.msra.mxu0 0
        %782 = vmatpush.bf16.msra.mxu0 0
        %783 = vmatpush.bf16.msra.mxu0 0
        %784 = vmatpush.bf16.msra.mxu0 0
        %785 = vmatpush.bf16.msra.mxu0 0
        %786 = vmatpush.bf16.msra.mxu0 0
        %787 = vmatpush.bf16.msra.mxu0 %v778
        %788 = vmatmul.bf16.gmra.mxu0 %v775
        %v789 = vpop.f32.mrf.mxu0
        %v790 = vadd.f32 0.0, %v789
        %v791 = vpop.f32.mrf.mxu0
        %792 = vdwg.mxu0
        %793 = vrot.lane.b32.xlu0 %v669, 56
        %v794 = vpop.permute.xlu0 %793
        %v796 = vsel %vm574, %v771, 0
        %v799 = vsel %vm650, %v794, 0
        %801 = vmatpush.bf16.msra.mxu0 0
        %802 = vmatpush.bf16.msra.mxu0 0
        %803 = vmatpush.bf16.msra.mxu0 0
        %804 = vmatpush.bf16.msra.mxu0 0
        %805 = vmatpush.bf16.msra.mxu0 0
        %806 = vmatpush.bf16.msra.mxu0 0
        %807 = vmatpush.bf16.msra.mxu0 0
        %808 = vmatpush.bf16.msra.mxu0 %v799
        %809 = vmatmul.bf16.gmra.mxu0 %v796
        %v810 = vpop.f32.mrf.mxu0
        %v811 = vadd.f32 0.0, %v810
        %v812 = vpop.f32.mrf.mxu0
        %813 = vdwg.mxu0
        %v814 = vpack.c.bf16 %v790, %v790
        %v815 = vpack.c.bf16 %v811, %v811
        %818 = vrot.lane.b32.xlu0 %v814, 8
        %v819 = vpop.permute.xlu0 %818
        %820 = vrot.lane.b32.xlu0 %v815, 8
        %v821 = vpop.permute.xlu0 %820
        %vm824 = vcmask 126016
        %825 = vst.msk [vmem:[#allocation3] sm:$0xf] %vm824, %v819
        %826 = vst.msk [vmem:[#allocation3 + $0x4] sm:$0xf] %vm824, %v821
        %827 = vrot.lane.b32.xlu0 %v698, 112
        %v828 = vpop.permute.xlu0 %827
        %829 = vrot.lane.b32.xlu0 %v571, 80
        %v830 = vpop.permute.xlu0 %829
        %v832 = vsel %vm574, %v828, 0
        %v835 = vsel %vm574, %v830, 0
        %837 = vmatpush.bf16.xpose.msra.mxu0 0
        %838 = vmatpush.bf16.xpose.msra.mxu0 0
        %839 = vmatpush.bf16.xpose.msra.mxu0 0
        %840 = vmatpush.bf16.xpose.msra.mxu0 0
        %841 = vmatpush.bf16.xpose.msra.mxu0 0
        %842 = vmatpush.bf16.xpose.msra.mxu0 0
        %843 = vmatpush.bf16.xpose.msra.mxu0 0
        %844 = vmatpush.bf16.xpose.msra.mxu0 %v835
        %845 = vmatmul.bf16.gmra.mxu0 %v832
        %v846 = vpop.f32.mrf.mxu0
        %v847 = vadd.f32 %v565, %v846
        %v848 = vpop.f32.mrf.mxu0
        %849 = vdwg.mxu0
        %850 = vrot.lane.b32.xlu0 %v724, 112
        %v851 = vpop.permute.xlu0 %850
        %852 = vrot.lane.b32.xlu0 %v596, 80
        %v853 = vpop.permute.xlu0 %852
        %v855 = vsel %vm574, %v851, 0
        %v858 = vsel %vm574, %v853, 0
        %860 = vmatpush.bf16.xpose.msra.mxu0 0
        %861 = vmatpush.bf16.xpose.msra.mxu0 0
        %862 = vmatpush.bf16.xpose.msra.mxu0 0
        %863 = vmatpush.bf16.xpose.msra.mxu0 0
        %864 = vmatpush.bf16.xpose.msra.mxu0 0
        %865 = vmatpush.bf16.xpose.msra.mxu0 0
        %866 = vmatpush.bf16.xpose.msra.mxu0 0
        %867 = vmatpush.bf16.xpose.msra.mxu0 %v858
        %868 = vmatmul.bf16.gmra.mxu0 %v855
        %v869 = vpop.f32.mrf.mxu0
        %v870 = vadd.f32 %v566, %v869
        %v871 = vpop.f32.mrf.mxu0
        %872 = vdwg.mxu0
        %v873 = vsel %vm574, %v847, -inf
        %874 = vmax.xlane.f32.xlu0 %v873
        %v875 = vpop.xlane.xlu0 %874
        %v876 = vsel %vm574, %v870, -inf
        %877 = vmax.xlane.f32.xlu0 %v876
        %v878 = vpop.xlane.xlu0 %877
        %v879 = vsub.f32 %v847, %v875
        %v880 = vsub.f32 %v870, %v878
        %v881 = vmul.f32 %v879, 1.442695
        %v882 = vpow.pop %v881
        %v883 = vmul.f32 %v880, 1.442695
        %v884 = vpow.pop %v883
        %v885 = vsel %vm574, %v882, 0.0
        %886 = vadd.xlane.f32.xlu0 %v885
        %v887 = vpop.xlane.xlu0 %886
        %v888 = vsel %vm574, %v884, 0.0
        %889 = vadd.xlane.f32.xlu0 %v888
        %v890 = vpop.xlane.xlu0 %889
        %v891 = vrcp.pop %v887
        %v892 = vrcp.pop %v890
        %v893 = vmul.f32 %v882, %v891
        %v894 = vmul.f32 %v884, %v892
        %v895 = vpack.c.bf16 %v893, %v893
        %v896 = vpack.c.bf16 %v894, %v894
        %897 = vrot.lane.b32.xlu0 %v644, 48
        %v898 = vpop.permute.xlu0 %897
        %v900 = vsel %vm574, %v895, 0
        %v903 = vsel %vm650, %v898, 0
        %905 = vmatpush.bf16.msra.mxu0 0
        %906 = vmatpush.bf16.msra.mxu0 0
        %907 = vmatpush.bf16.msra.mxu0 0
        %908 = vmatpush.bf16.msra.mxu0 0
        %909 = vmatpush.bf16.msra.mxu0 0
        %910 = vmatpush.bf16.msra.mxu0 0
        %911 = vmatpush.bf16.msra.mxu0 0
        %912 = vmatpush.bf16.msra.mxu0 %v903
        %913 = vmatmul.bf16.gmra.mxu0 %v900
        %v914 = vpop.f32.mrf.mxu0
        %v915 = vadd.f32 0.0, %v914
        %v916 = vpop.f32.mrf.mxu0
        %917 = vdwg.mxu0
        %918 = vrot.lane.b32.xlu0 %v669, 48
        %v919 = vpop.permute.xlu0 %918
        %v921 = vsel %vm574, %v896, 0
        %v924 = vsel %vm650, %v919, 0
        %926 = vmatpush.bf16.msra.mxu0 0
        %927 = vmatpush.bf16.msra.mxu0 0
        %928 = vmatpush.bf16.msra.mxu0 0
        %929 = vmatpush.bf16.msra.mxu0 0
        %930 = vmatpush.bf16.msra.mxu0 0
        %931 = vmatpush.bf16.msra.mxu0 0
        %932 = vmatpush.bf16.msra.mxu0 0
        %933 = vmatpush.bf16.msra.mxu0 %v924
        %934 = vmatmul.bf16.gmra.mxu0 %v921
        %v935 = vpop.f32.mrf.mxu0
        %v936 = vadd.f32 0.0, %v935
        %v937 = vpop.f32.mrf.mxu0
        %938 = vdwg.mxu0
        %v939 = vpack.c.bf16 %v915, %v915
        %v940 = vpack.c.bf16 %v936, %v936
        %943 = vrot.lane.b32.xlu0 %v939, 16
        %v944 = vpop.permute.xlu0 %943
        %945 = vrot.lane.b32.xlu0 %v940, 16
        %v946 = vpop.permute.xlu0 %945
        %vm949 = vcmask 191616
        %950 = vst.msk [vmem:[#allocation3] sm:$0xf] %vm949, %v944
        %951 = vst.msk [vmem:[#allocation3 + $0x4] sm:$0xf] %vm949, %v946
        %952 = vrot.lane.b32.xlu0 %v698, 104
        %v953 = vpop.permute.xlu0 %952
        %954 = vrot.lane.b32.xlu0 %v571, 72
        %v955 = vpop.permute.xlu0 %954
        %v957 = vsel %vm574, %v953, 0
        %v960 = vsel %vm574, %v955, 0
        %962 = vmatpush.bf16.xpose.msra.mxu0 0
        %963 = vmatpush.bf16.xpose.msra.mxu0 0
        %964 = vmatpush.bf16.xpose.msra.mxu0 0
        %965 = vmatpush.bf16.xpose.msra.mxu0 0
        %966 = vmatpush.bf16.xpose.msra.mxu0 0
        %967 = vmatpush.bf16.xpose.msra.mxu0 0
        %968 = vmatpush.bf16.xpose.msra.mxu0 0
        %969 = vmatpush.bf16.xpose.msra.mxu0 %v960
        %970 = vmatmul.bf16.gmra.mxu0 %v957
        %v971 = vpop.f32.mrf.mxu0
        %v972 = vadd.f32 %v565, %v971
        %v973 = vpop.f32.mrf.mxu0
        %974 = vdwg.mxu0
        %975 = vrot.lane.b32.xlu0 %v724, 104
        %v976 = vpop.permute.xlu0 %975
        %977 = vrot.lane.b32.xlu0 %v596, 72
        %v978 = vpop.permute.xlu0 %977
        %v980 = vsel %vm574, %v976, 0
        %v983 = vsel %vm574, %v978, 0
        %985 = vmatpush.bf16.xpose.msra.mxu0 0
        %986 = vmatpush.bf16.xpose.msra.mxu0 0
        %987 = vmatpush.bf16.xpose.msra.mxu0 0
        %988 = vmatpush.bf16.xpose.msra.mxu0 0
        %989 = vmatpush.bf16.xpose.msra.mxu0 0
        %990 = vmatpush.bf16.xpose.msra.mxu0 0
        %991 = vmatpush.bf16.xpose.msra.mxu0 0
        %992 = vmatpush.bf16.xpose.msra.mxu0 %v983
        %993 = vmatmul.bf16.gmra.mxu0 %v980
        %v994 = vpop.f32.mrf.mxu0
        %v995 = vadd.f32 %v566, %v994
        %v996 = vpop.f32.mrf.mxu0
        %997 = vdwg.mxu0
        %v998 = vsel %vm574, %v972, -inf
        %999 = vmax.xlane.f32.xlu0 %v998
        %v1000 = vpop.xlane.xlu0 %999
        %v1001 = vsel %vm574, %v995, -inf
        %1002 = vmax.xlane.f32.xlu0 %v1001
        %v1003 = vpop.xlane.xlu0 %1002
        %v1004 = vsub.f32 %v972, %v1000
        %v1005 = vsub.f32 %v995, %v1003
        %v1006 = vmul.f32 %v1004, 1.442695
        %v1007 = vpow.pop %v1006
        %v1008 = vmul.f32 %v1005, 1.442695
        %v1009 = vpow.pop %v1008
        %v1010 = vsel %vm574, %v1007, 0.0
        %1011 = vadd.xlane.f32.xlu0 %v1010
        %v1012 = vpop.xlane.xlu0 %1011
        %v1013 = vsel %vm574, %v1009, 0.0
        %1014 = vadd.xlane.f32.xlu0 %v1013
        %v1015 = vpop.xlane.xlu0 %1014
        %v1016 = vrcp.pop %v1012
        %v1017 = vrcp.pop %v1015
        %v1018 = vmul.f32 %v1007, %v1016
        %v1019 = vmul.f32 %v1009, %v1017
        %v1020 = vpack.c.bf16 %v1018, %v1018
        %v1021 = vpack.c.bf16 %v1019, %v1019
        %1022 = vrot.lane.b32.xlu0 %v644, 40
        %v1023 = vpop.permute.xlu0 %1022
        %v1025 = vsel %vm574, %v1020, 0
        %v1028 = vsel %vm650, %v1023, 0
        %1030 = vmatpush.bf16.msra.mxu0 0
        %1031 = vmatpush.bf16.msra.mxu0 0
        %1032 = vmatpush.bf16.msra.mxu0 0
        %1033 = vmatpush.bf16.msra.mxu0 0
        %1034 = vmatpush.bf16.msra.mxu0 0
        %1035 = vmatpush.bf16.msra.mxu0 0
        %1036 = vmatpush.bf16.msra.mxu0 0
        %1037 = vmatpush.bf16.msra.mxu0 %v1028
        %1038 = vmatmul.bf16.gmra.mxu0 %v1025
        %v1039 = vpop.f32.mrf.mxu0
        %v1040 = vadd.f32 0.0, %v1039
        %v1041 = vpop.f32.mrf.mxu0
        %1042 = vdwg.mxu0
        %1043 = vrot.lane.b32.xlu0 %v669, 40
        %v1044 = vpop.permute.xlu0 %1043
        %v1046 = vsel %vm574, %v1021, 0
        %v1049 = vsel %vm650, %v1044, 0
        %1051 = vmatpush.bf16.msra.mxu0 0
        %1052 = vmatpush.bf16.msra.mxu0 0
        %1053 = vmatpush.bf16.msra.mxu0 0
        %1054 = vmatpush.bf16.msra.mxu0 0
        %1055 = vmatpush.bf16.msra.mxu0 0
        %1056 = vmatpush.bf16.msra.mxu0 0
        %1057 = vmatpush.bf16.msra.mxu0 0
        %1058 = vmatpush.bf16.msra.mxu0 %v1049
        %1059 = vmatmul.bf16.gmra.mxu0 %v1046
        %v1060 = vpop.f32.mrf.mxu0
        %v1061 = vadd.f32 0.0, %v1060
        %v1062 = vpop.f32.mrf.mxu0
        %1063 = vdwg.mxu0
        %v1064 = vpack.c.bf16 %v1040, %v1040
        %v1065 = vpack.c.bf16 %v1061, %v1061
        %1068 = vrot.lane.b32.xlu0 %v1064, 24
        %v1069 = vpop.permute.xlu0 %1068
        %1070 = vrot.lane.b32.xlu0 %v1065, 24
        %v1071 = vpop.permute.xlu0 %1070
        %vm1074 = vcmask 257216
        %1075 = vst.msk [vmem:[#allocation3] sm:$0xf] %vm1074, %v1069
        %1076 = vst.msk [vmem:[#allocation3 + $0x4] sm:$0xf] %vm1074, %v1071
        %v1077 = vld [vmem:[#allocation3] sm:$0xf]
        %v1078 = vld [vmem:[#allocation3 + $0x4] sm:$0xf]
        %v1079 = vld [vmem:[%s414] sm:$0xf]
        %v1080 = vld [vmem:[%s414 + $0x4] sm:$0xf]
        %v1081 = vld [vmem:[%s414 + $0x8] sm:$0xf]
        %v1082 = vld [vmem:[%s414 + $0xc] sm:$0xf]
        %v1083 = vperm.slane %v501, 3
        %v1086 = vunpack.c.l.b16 %v1077
        %v1087 = vunpack.c.l.b16 %v1078
        %v1088 = vpack.c.b16 %v1087, %v1086
        %v1093 = vunpack.c.l.b16 %v1079
        %v1094 = vunpack.c.l.b16 %v1080
        %v1095 = vunpack.c.l.b16 %v1081
        %v1096 = vunpack.c.l.b16 %v1082
        %v1097 = vpack.c.b16 %v1094, %v1093
        %v1098 = vpack.c.b16 %v1096, %v1095
        %v1102 = vsel %vm520, %v1088, 0
        %1104 = vmatpush.bf16.msra.mxu0 0
        %1105 = vmatpush.bf16.msra.mxu0 0
        %1106 = vmatpush.bf16.msra.mxu0 0
        %1107 = vmatpush.bf16.msra.mxu0 0
        %1108 = vmatpush.bf16.msra.mxu0 0
        %1109 = vmatpush.bf16.msra.mxu0 0
        %1110 = vmatpush.bf16.msra.mxu0 %v1098
        %1111 = vmatpush.bf16.msra.mxu0 %v1097
        %1112 = vmatmul.bf16.gmra.mxu0 %v1102
        %v1113 = vpop.f32.mrf.mxu0
        %v1114 = vadd.f32 %v1083, %v1113
        %v1115 = vpop.f32.mrf.mxu0
        %v1116 = vadd.f32 %v1083, %v1115
        %1117 = vdwg.mxu0
        %v1118 = vadd.f32 %v499, %v1114
        %v1119 = vadd.f32 %v500, %v1116
        %v1120 = vsel %vm520, %v1118, 0.0
        %1121 = vadd.xlane.f32.xlu0 %v1120
        %v1122 = vpop.xlane.xlu0 %1121
        %v1123 = vsel %vm520, %v1119, 0.0
        %1124 = vadd.xlane.f32.xlu0 %v1123
        %v1125 = vpop.xlane.xlu0 %1124
        %v1126 = vrcp.pop 32.0
        %v1127 = vmul.f32 32.0, %v1126
        %v1128 = vsub.f32 1.0, %v1127
        %v1129 = vmul.f32 %v1126, %v1128
        %v1130 = vadd.f32 %v1126, %v1129
        %vm1131 = vweird.f32 %v1126
        %v1132 = vsel %vm1131, %v1126, %v1130
        %v1133 = vmul.f32 %v1122, %v1132
        %v1134 = vmul.f32 %v1125, %v1132
        %v1135 = vsub.f32 %v1118, %v1133
        %v1136 = vsub.f32 %v1119, %v1134
        %v1137 = vmul.f32 %v1135, %v1135
        %v1138 = vmul.f32 %v1136, %v1136
        %v1139 = vsel %vm520, %v1137, 0.0
        %1140 = vadd.xlane.f32.xlu0 %v1139
        %v1141 = vpop.xlane.xlu0 %1140
        %v1142 = vsel %vm520, %v1138, 0.0
        %1143 = vadd.xlane.f32.xlu0 %v1142
        %v1144 = vpop.xlane.xlu0 %1143
        %v1145 = vmul.f32 %v1141, %v1132
        %v1146 = vmul.f32 %v1144, %v1132
        %v1147 = vadd.f32 %v1145, 1e-12
        %v1148 = vadd.f32 %v1146, 1e-12
        %v1149 = vrsqrt.pop %v1147
        %v1150 = vmul.f32 %v1149, %v1147
        %v1151 = vmul.f32 %v1150, %v1149
        %v1152 = vmul.f32 0.5, %v1151
        %v1153 = vsub.f32 1.5, %v1152
        %v1154 = vmul.f32 %v1149, %v1153
        %vm1155 = vweird.f32 %v1147
        %vm1156 = vweird.f32 %v1149
        %vm1157 = vmor %vm1155, %vm1156
        %v1158 = vsel %vm1157, %v1149, %v1154
        %v1159 = vrsqrt.pop %v1148
        %v1160 = vmul.f32 %v1159, %v1148
        %v1161 = vmul.f32 %v1160, %v1159
        %v1162 = vmul.f32 0.5, %v1161
        %v1163 = vsub.f32 1.5, %v1162
        %v1164 = vmul.f32 %v1159, %v1163
        %vm1165 = vweird.f32 %v1148
        %vm1166 = vweird.f32 %v1159
        %vm1167 = vmor %vm1165, %vm1166
        %v1168 = vsel %vm1167, %v1159, %v1164
        %v1169 = vmul.f32 %v1135, %v1158
        %v1170 = vmul.f32 %v1136, %v1168
        %v1171 = vperm.slane %v501, 4
        %v1172 = vmul.f32 %v1171, %v1169
        %v1173 = vmul.f32 %v1171, %v1170
        %v1174 = vperm.slane %v501, 5
        %v1175 = vadd.f32 %v1172, %v1174
        %v1176 = vadd.f32 %v1173, %v1174
        %v1177 = vld [vmem:[%s419] sm:$0xf]
        %v1178 = vld [vmem:[%s419 + $0x4] sm:$0xf]
        %v1179 = vld [vmem:[%s419 + $0x8] sm:$0xf]
        %v1180 = vld [vmem:[%s419 + $0xc] sm:$0xf]
        %v1181 = vpack.c.bf16 %v1176, %v1175
        %v1182 = vperm.slane %v501, 6
        %v1187 = vunpack.c.l.b16 %v1177
        %v1188 = vunpack.c.l.b16 %v1178
        %v1189 = vunpack.c.l.b16 %v1179
        %v1190 = vunpack.c.l.b16 %v1180
        %v1191 = vpack.c.b16 %v1188, %v1187
        %v1192 = vpack.c.b16 %v1190, %v1189
        %v1196 = vsel %vm520, %v1181, 0
        %1198 = vmatpush.bf16.msra.mxu0 0
        %1199 = vmatpush.bf16.msra.mxu0 0
        %1200 = vmatpush.bf16.msra.mxu0 0
        %1201 = vmatpush.bf16.msra.mxu0 0
        %1202 = vmatpush.bf16.msra.mxu0 0
        %1203 = vmatpush.bf16.msra.mxu0 0
        %1204 = vmatpush.bf16.msra.mxu0 %v1192
        %1205 = vmatpush.bf16.msra.mxu0 %v1191
        %1206 = vmatmul.bf16.gmra.mxu0 %v1196
        %v1207 = vpop.f32.mrf.mxu0
        %v1208 = vadd.f32 %v1182, %v1207
        %v1209 = vpop.f32.mrf.mxu0
        %v1210 = vadd.f32 %v1182, %v1209
        %1211 = vdwg.mxu0
        %v1212 = vmul.f32 %v1208, 0.5
        %v1213 = vmul.f32 %v1210, 0.5
        %v1214 = vmul.f32 %v1208, 0.70710677
        %v1215 = vmul.f32 %v1210, 0.70710677
        %v1216 = vmul.f32 %v1214, %v1214
        %v1217 = vmin.f32 16.0, %v1216
        %v1218 = vmul.f32 %v1217, 2.1237322e-06
        %v1219 = vadd.f32 %v1218, 0.00028619796
        %v1220 = vmul.f32 %v1217, %v1219
        %v1221 = vadd.f32 %v1220, 0.0036580483
        %v1222 = vmul.f32 %v1217, %v1221
        %v1223 = vadd.f32 %v1222, 0.05243302
        %v1224 = vmul.f32 %v1217, %v1223
        %v1225 = vadd.f32 %v1224, 0.18741608
        %v1226 = vmul.f32 %v1217, %v1225
        %v1227 = vadd.f32 %v1226, 1.1283791
        %v1228 = vmul.f32 %v1214, %v1227
        %v1229 = vmul.f32 %v1217, 3.8918573e-05
        %v1230 = vadd.f32 %v1229, 0.001143296
        %v1231 = vmul.f32 %v1217, %v1230
        %v1232 = vadd.f32 %v1231, 0.014752088
        %v1233 = vmul.f32 %v1217, %v1232
        %v1234 = vadd.f32 %v1233, 0.112945676
        %v1235 = vmul.f32 %v1217, %v1234
        %v1236 = vadd.f32 %v1235, 0.4994258
        %v1237 = vmul.f32 %v1217, %v1236
        %v1238 = vadd.f32 %v1237, 1.0
        %v1239 = vrcp.pop %v1238
        %v1240 = vmul.f32 %v1238, %v1239
        %v1241 = vsub.f32 1.0, %v1240
        %v1242 = vmul.f32 %v1239, %v1241
        %v1243 = vadd.f32 %v1239, %v1242
        %vm1244 = vweird.f32 %v1238
        %vm1245 = vweird.f32 %v1239
        %vm1246 = vmor %vm1244, %vm1245
        %v1247 = vsel %vm1246, %v1239, %v1243
        %v1248 = vand.u32 2147483647, %v1238
        %vm1249 = vcmp.eq.f32.partialorder %v1248, 8.507059e+37
        %v1250 = vand.u32 %v1238, 2147483648
        %v1251 = vor.u32 1.1754944e-38, %v1250
        %v1252 = vsel %vm1249, %v1251, %v1247
        %v1253 = vmul.f32 %v1228, %v1252
        %v1254 = vmin.f32 %v1253, 1.0
        %v1255 = vmax.f32 %v1254, -1.0
        %v1256 = vmul.f32 %v1215, %v1215
        %v1257 = vmin.f32 16.0, %v1256
        %v1258 = vmul.f32 %v1257, 2.1237322e-06
        %v1259 = vadd.f32 %v1258, 0.00028619796
        %v1260 = vmul.f32 %v1257, %v1259
        %v1261 = vadd.f32 %v1260, 0.0036580483
        %v1262 = vmul.f32 %v1257, %v1261
        %v1263 = vadd.f32 %v1262, 0.05243302
        %v1264 = vmul.f32 %v1257, %v1263
        %v1265 = vadd.f32 %v1264, 0.18741608
        %v1266 = vmul.f32 %v1257, %v1265
        %v1267 = vadd.f32 %v1266, 1.1283791
        %v1268 = vmul.f32 %v1215, %v1267
        %v1269 = vmul.f32 %v1257, 3.8918573e-05
        %v1270 = vadd.f32 %v1269, 0.001143296
        %v1271 = vmul.f32 %v1257, %v1270
        %v1272 = vadd.f32 %v1271, 0.014752088
        %v1273 = vmul.f32 %v1257, %v1272
        %v1274 = vadd.f32 %v1273, 0.112945676
        %v1275 = vmul.f32 %v1257, %v1274
        %v1276 = vadd.f32 %v1275, 0.4994258
        %v1277 = vmul.f32 %v1257, %v1276
        %v1278 = vadd.f32 %v1277, 1.0
        %v1279 = vrcp.pop %v1278
        %v1280 = vmul.f32 %v1278, %v1279
        %v1281 = vsub.f32 1.0, %v1280
        %v1282 = vmul.f32 %v1279, %v1281
        %v1283 = vadd.f32 %v1279, %v1282
        %vm1284 = vweird.f32 %v1278
        %vm1285 = vweird.f32 %v1279
        %vm1286 = vmor %vm1284, %vm1285
        %v1287 = vsel %vm1286, %v1279, %v1283
        %v1288 = vand.u32 2147483647, %v1278
        %vm1289 = vcmp.eq.f32.partialorder %v1288, 8.507059e+37
        %v1290 = vand.u32 %v1278, 2147483648
        %v1291 = vor.u32 1.1754944e-38, %v1290
        %v1292 = vsel %vm1289, %v1291, %v1287
        %v1293 = vmul.f32 %v1268, %v1292
        %v1294 = vmin.f32 %v1293, 1.0
        %v1295 = vmax.f32 %v1294, -1.0
        %v1296 = vadd.f32 %v1255, 1.0
        %v1297 = vadd.f32 %v1295, 1.0
        %v1298 = vmul.f32 %v1212, %v1296
        %v1299 = vmul.f32 %v1213, %v1297
        %v1300 = vpack.c.bf16 %v1299, %v1298
        %v1301 = vld [vmem:[%s424] sm:$0xf]
        %v1302 = vld [vmem:[%s424 + $0x4] sm:$0xf]
        %v1303 = vld [vmem:[%s424 + $0x8] sm:$0xf]
        %v1304 = vld [vmem:[%s424 + $0xc] sm:$0xf]
        %v1305 = vld [vmem:[%s424 + $0x10] sm:$0xf]
        %v1306 = vld [vmem:[%s424 + $0x14] sm:$0xf]
        %v1307 = vld [vmem:[%s424 + $0x18] sm:$0xf]
        %v1308 = vld [vmem:[%s424 + $0x1c] sm:$0xf]
        %v1309 = vperm.slane %v501, 7
        %v1318 = vunpack.c.l.b16 %v1301
        %v1319 = vunpack.c.l.b16 %v1302
        %v1320 = vunpack.c.l.b16 %v1303
        %v1321 = vunpack.c.l.b16 %v1304
        %v1322 = vunpack.c.l.b16 %v1305
        %v1323 = vunpack.c.l.b16 %v1306
        %v1324 = vunpack.c.l.b16 %v1307
        %v1325 = vunpack.c.l.b16 %v1308
        %v1326 = vpack.c.b16 %v1319, %v1318
        %v1327 = vpack.c.b16 %v1321, %v1320
        %v1328 = vpack.c.b16 %v1323, %v1322
        %v1329 = vpack.c.b16 %v1325, %v1324
        %vm1334 = vcmask 523264
        %v1336 = vsel %vm1334, %v1300, 0
        %1338 = vmatpush.bf16.msra.mxu0 0
        %1339 = vmatpush.bf16.msra.mxu0 0
        %1340 = vmatpush.bf16.msra.mxu0 0
        %1341 = vmatpush.bf16.msra.mxu0 0
        %1342 = vmatpush.bf16.msra.mxu0 %v1329
        %1343 = vmatpush.bf16.msra.mxu0 %v1328
        %1344 = vmatpush.bf16.msra.mxu0 %v1327
        %1345 = vmatpush.bf16.msra.mxu0 %v1326
        %1346 = vmatmul.bf16.gmra.mxu0 %v1336
        %v1347 = vpop.f32.mrf.mxu0
        %v1348 = vadd.f32 %v1309, %v1347
        %v1349 = vpop.f32.mrf.mxu0
        %v1350 = vadd.f32 %v1309, %v1349
        %1351 = vdwg.mxu0
        %v1352 = vadd.f32 %v1175, %v1348
        %v1353 = vadd.f32 %v1176, %v1350
        %v1354 = vsel %vm520, %v1352, 0.0
        %1355 = vadd.xlane.f32.xlu0 %v1354
        %v1356 = vpop.xlane.xlu0 %1355
        %v1357 = vsel %vm520, %v1353, 0.0
        %1358 = vadd.xlane.f32.xlu0 %v1357
        %v1359 = vpop.xlane.xlu0 %1358
        %v1360 = vmul.f32 %v1356, %v1132
        %v1361 = vmul.f32 %v1359, %v1132
        %v1362 = vsub.f32 %v1352, %v1360
        %v1363 = vsub.f32 %v1353, %v1361
        %v1364 = vmul.f32 %v1362, %v1362
        %v1365 = vmul.f32 %v1363, %v1363
        %v1366 = vsel %vm520, %v1364, 0.0
        %1367 = vadd.xlane.f32.xlu0 %v1366
        %v1368 = vpop.xlane.xlu0 %1367
        %v1369 = vsel %vm520, %v1365, 0.0
        %1370 = vadd.xlane.f32.xlu0 %v1369
        %v1371 = vpop.xlane.xlu0 %1370
        %v1372 = vmul.f32 %v1368, %v1132
        %v1373 = vmul.f32 %v1371, %v1132
        %v1374 = vadd.f32 %v1372, 1e-12
        %v1375 = vadd.f32 %v1373, 1e-12
        %v1376 = vrsqrt.pop %v1374
        %v1377 = vmul.f32 %v1376, %v1374
        %v1378 = vmul.f32 %v1377, %v1376
        %v1379 = vmul.f32 0.5, %v1378
        %v1380 = vsub.f32 1.5, %v1379
        %v1381 = vmul.f32 %v1376, %v1380
        %vm1382 = vweird.f32 %v1374
        %vm1383 = vweird.f32 %v1376
        %vm1384 = vmor %vm1382, %vm1383
        %v1385 = vsel %vm1384, %v1376, %v1381
        %v1386 = vrsqrt.pop %v1375
        %v1387 = vmul.f32 %v1386, %v1375
        %v1388 = vmul.f32 %v1387, %v1386
        %v1389 = vmul.f32 0.5, %v1388
        %v1390 = vsub.f32 1.5, %v1389
        %v1391 = vmul.f32 %v1386, %v1390
        %vm1392 = vweird.f32 %v1375
        %vm1393 = vweird.f32 %v1386
        %vm1394 = vmor %vm1392, %vm1393
        %v1395 = vsel %vm1394, %v1386, %v1391
        %v1396 = vmul.f32 %v1362, %v1385
        %v1397 = vmul.f32 %v1363, %v1395
        %v1398 = vperm.slane %v502, 0
        %v1399 = vmul.f32 %v1398, %v1396
        %v1400 = vmul.f32 %v1398, %v1397
        %v1401 = vperm.slane %v502, 1
        %v1402 = vadd.f32 %v1399, %v1401
        %v1403 = vadd.f32 %v1400, %v1401
        %1404 = vst.msk [vmem:[#allocation2] sm:$0xff] %vm520, %v1402
        %1405 = vst.msk [vmem:[#allocation2 + $0x8] sm:$0xff] %vm520, %v1403
        %p1406 = scmp.eq.s32.totalorder %s25, 1
        // Predicated region
        $region57: #{discriminator_forward.1} parent=51 // pred_check
          %p1407 = pneg %p1406
        $region58: #{discriminator_forward.1} parent=51 // pred_check_branch
          %1409 = sbr.rel (%p1407) target = $region60
        $region59: #{discriminator_forward.1} parent=51 // pred_region
          %v1410 = vperm.slane %v432, 2
          %v1411 = vmul.f32 %v1402, %v1410
          %v1412 = vmul.f32 %v1403, %v1410
          %v1413 = vsel %vm520, %v1411, 0.0
          %1414 = vadd.xlane.f32.xlu0 %v1413
          %v1415 = vpop.xlane.xlu0 %1414
          %v1416 = vsel %vm520, %v1412, 0.0
          %1417 = vadd.xlane.f32.xlu0 %v1416
          %v1418 = vpop.xlane.xlu0 %1417
          %v1420 = vrot.slane %v432, 3
          %s1421 = vtos %v1420
          %v1422 = vstv %s1421
          %v1424 = vadd.f32 %v1415, %v1422
          %v1425 = vadd.f32 %v1418, %v1422
          %v1428 = vlaneseq
          %v1429 = vand.u32 %v1428, 127
          %v1430 = vperm.slane %v1424, %v1429
          %v1431 = vperm.slane %v1425, %v1429
          %vm1434 = vcmask 57344
          %1435 = vst.msk [vmem:[#allocation4] sm:$0x1] %vm1434, %v1430
          %1436 = vst.msk [vmem:[#allocation4 + $0x1] sm:$0x1] %vm1434, %v1431
        $region60: #{discriminator_forward.1} parent=51 // pred_fallthru
          _
        // Predicated region
        $region61: #{discriminator_forward.1} parent=51 // pred_check
          %p1437 = pneg %p253
        $region62: #{discriminator_forward.1} parent=51 // pred_check_branch
          %1439 = sbr.rel (%p1437) target = $region64
        $region63: #{discriminator_forward.1} parent=51 // pred_region
          %s1440 = smul.u32 2, %s24
          %1442 = vsyncadd [#allocation5], 0
          %s1443 = scalar_lea.hbm %s8, %s1440
          %s1444 = sshll.u32 [#allocation4], 4
          %s1445 = int_to_ptr.vmem [resolvable:$true] %s1444
          %s1446 = sshll.u32 %s1443, 4
          %s1447 = int_to_ptr.hbm [resolvable:$true] %s1446
          %1452 = dma.vmem_to_hbm [thread:$0]  %s1445, 32, %s1447, [#allocation5], 16, 16, 1
        $region64: #{discriminator_forward.1} parent=51 // pred_fallthru
          _
        // Predicated region
        $region65: #{discriminator_forward.1} parent=51 // pred_check
          %p1453 = pneg %p253
        $region66: #{discriminator_forward.1} parent=51 // pred_check_branch
          %1455 = sbr.rel (%p1453) target = $region68
        $region67: #{discriminator_forward.1} parent=51 // pred_region
          %1457 = dma.done [#allocation5], 32
        $region68: #{discriminator_forward.1} parent=51 // pred_fallthru
          _
      $region52: #{discriminator_forward.1} parent=5 // pred_fallthru
        _
      %p1458 = scmp.le.s32.totalorder 2, %s15
      // Predicated region
      $region69: #{discriminator_forward.1} parent=5 // pred_check
        %p1459 = pneg %p1458
      $region70: #{discriminator_forward.1} parent=5 // pred_check_branch
        %1461 = sbr.rel (%p1459) target = $region72
      $region71: #{discriminator_forward.1} parent=5 // pred_region
        %s1462 = ssub.s32 %s15, 2
      $region72: #{discriminator_forward.1} parent=5 // pred_fallthru
        _
    $region6: #{discriminator_forward.1} parent=1 // loop_footer
      %s19 = sadd.s32 1, %s15
    $region7: #{discriminator_forward.1} parent=1 // loop_footer_branch
      %14 = sbr.rel target = $region3
    $region8: #{discriminator_forward.1} parent=1 // loop_exit
      _
    %1463 = vsyncpa [#allocation5], 1
    %s1464 = scalar_lea.sflag [#allocation5], 1
    %1465 = vsyncpa %s1464, 1

</llo_original>
